<compile_context>
chip_gen: v6e
topology: v6e:2x2x1
jax: 0.10.0
libtpu: 0.0.40
codegen_flags: <defaults>
</compile_context>

<pallas_src>
import jax
import jax.numpy as jnp
from jax.experimental import pallas as pl
from jax.experimental.pallas import tpu as pltpu

N_FFT = 512
HOP = 256
WIN = 512
F_BINS = N_FFT // 2 + 1          # 257
TT_MAX = 1024                    # max frames per grid step (output lane axis)

# bf16 operands, f32 accumulation.  Flip to jnp.float32 (and add
# precision=HIGHEST to the dot) only if strict f32 parity is required.
COMPUTE_DTYPE = jnp.bfloat16


def _round_up(x: int, m: int) -> int:
    return ((x + m - 1) // m) * m


def _stft_kernel(frames_ref, basis_ref, mag_ref):
    # frames_ref: (1, tt, 512) bf16
    # basis_ref : (512, 512) bf16, rows = [cos k=0..255 | cos k=256 | -sin k=1..255],
    #             columns = the n_fft sample axis (i.e. basis is pre-transposed).
    # mag_ref   : (1, 257, tt) f32 — already in torch.stft (F, T) orientation.
    frames = frames_ref[0]                                      # (tt, 512)
    # reim[f, t] = sum_n basis[f, n] * frames[t, n]   (q @ k.T contraction)
    reim = jax.lax.dot_general(
        basis_ref[...], frames,
        dimension_numbers=(((1,), (1,)), ((), ())),
        preferred_element_type=jnp.float32)                     # (512, tt) f32
    re = reim[:256, :]                                          # cos, k = 0..255
    imh = reim[256:, :]          # row 0 = Nyquist cos (borrowed slot), rows 1..255 = -sin k
    row = jax.lax.broadcasted_iota(jnp.int32, imh.shape, 0)
    im = jnp.where(row == 0, 0.0, imh)                          # DC imag part is 0
    mag_ref[0, :256, :] = jnp.sqrt(re * re + im * im)           # bins 0..255
    mag_ref[0, 256:257, :] = jnp.abs(imh[:1, :])                # bin 256 (Nyquist)


def _make_basis():
    n = jnp.arange(N_FFT, dtype=jnp.float32)
    window = 0.5 - 0.5 * jnp.cos(2.0 * jnp.pi * n / WIN)        # periodic Hann
    k = jnp.arange(F_BINS, dtype=jnp.float32)
    ang = 2.0 * jnp.pi * jnp.outer(n, k) / N_FFT                # (512, 257)
    cos_b = window[:, None] * jnp.cos(ang)
    sin_b = window[:, None] * (-jnp.sin(ang))
    # 512 useful columns: sin(k=0) and sin(k=256) are identically zero, so the
    # Nyquist cos column takes the DC-sin slot -> (512, 512), no wasted MXU cols.
    packed = jnp.concatenate(
        [cos_b[:, :256], cos_b[:, 256:257], sin_b[:, 1:256]], axis=1)   # (512, 512)
    return jnp.transpose(packed).astype(COMPUTE_DTYPE)          # (f_col, n_fft)


@jax.jit
def feat_pipeline(waveform: jnp.ndarray) -> jnp.ndarray:
    """waveform: (B, N) float32 -> magnitude spectrogram (B, 257, T) float32."""
    B, N = waveform.shape
    pad = N_FFT // 2
    if N <= pad:
        raise ValueError("reflect padding requires N > n_fft//2 (= 256)")

    # --- framing glue (center=True, reflect pad), all at bf16 width ---------
    x = jnp.pad(waveform.astype(COMPUTE_DTYPE), ((0, 0), (pad, pad)),
                mode="reflect")                                  # (B, N + 512)
    T = 1 + N // HOP
    L = x.shape[1]
    L_pad = _round_up(L, HOP)
    x = jnp.pad(x, ((0, 0), (0, L_pad - L)))                     # zeros never read
    blocks = x.reshape(B, L_pad // HOP, HOP)                     # (B, nblk, 256)
    # hop == n_fft/2  =>  frame t is exactly blocks t and t+1 (no gather)
    frames = jnp.concatenate(
        [blocks[:, :T, :], blocks[:, 1:T + 1, :]], axis=-1)      # (B, T, 512) bf16

    basis = _make_basis()                                        # (512, 512) bf16

    # --- frame-tile choice: lane axis of the output store -------------------
    if T < 128:
        tt = T                                   # block == full dim (tiny inputs)
    else:
        tt = min(TT_MAX, (T // 128) * 128)       # lane-dense, never exceeds T
        if B == 1:
            # keep >= 2 grid steps so both v7x TensorCores get work
            tt = min(tt, max(128, ((T // 2) // 128) * 128))
    grid = (B, pl.cdiv(T, tt))

    # --- Pallas hot path: one MXU matmul per tile, transposed epilogue ------
    mag = pl.pallas_call(
        _stft_kernel,
        out_shape=jax.ShapeDtypeStruct((B, F_BINS, T), jnp.float32),
        grid_spec=pltpu.PrefetchScalarGridSpec(
            num_scalar_prefetch=0,
            grid=grid,
            in_specs=[
                pl.BlockSpec((1, tt, N_FFT), lambda b, i: (b, i, 0)),
                pl.BlockSpec((N_FFT, N_FFT), lambda b, i: (0, 0)),
            ],
            out_specs=pl.BlockSpec((1, F_BINS, tt), lambda b, i: (b, 0, i)),
        ),
        compiler_params=pltpu.CompilerParams(
            dimension_semantics=("parallel", "parallel"),
            vmem_limit_bytes=32 * 1024 * 1024),
    )(frames, basis)

    return mag                                   # (B, 257, T), torch.stft layout


if __name__ == "__main__":
    key = jax.random.PRNGKey(0)
    B, N = 2, 2048                               # small batch of 1-D waveforms
    waveform = jax.random.normal(key, (B, N), dtype=jnp.float32)

    spec = feat_pipeline(waveform)
    jax.block_until_ready(spec)

    T = 1 + N // HOP
    assert spec.shape == (B, F_BINS, T), spec.shape
    assert spec.dtype == jnp.float32
    assert bool(jnp.all(jnp.isfinite(spec)))
    assert bool(jnp.all(spec >= 0.0))
    print("KERNEL_OK")
</pallas_src>

<mosaic_0001>
module attributes {stable_mosaic.version = 11 : i64} {
  func.func @_stft_kernel(%arg0: i32, %arg1: i32, %arg2: memref<1x9x512xbf16, #tpu.memory_space<vmem>>, %arg3: memref<512x512xbf16, #tpu.memory_space<vmem>>, %arg4: memref<1x257x9xf32, #tpu.memory_space<vmem>>) attributes {dimension_semantics = [#tpu.dimension_semantics<parallel>, #tpu.dimension_semantics<parallel>], iteration_bounds = array<i64: 2, 1>, scalar_prefetch = 0 : i64, scratch_operands = 0 : i64, tpu.core_type = #tpu.core_type<tc>, window_params = [{transform_indices = @transform_0, window_bounds = array<i64: 1, 9, 512>}, {pipeline_mode = #tpu.pipeline_mode<synchronous>, transform_indices = @transform_1, window_bounds = array<i64: 512, 512>}, {transform_indices = @transform_2, window_bounds = array<i64: 1, 257, 9>}]} {
    %c0 = arith.constant 0 : index
    %c0_0 = arith.constant 0 : index
    %c0_1 = arith.constant 0 : index
    %0 = vector.load %arg2[%c0, %c0_0, %c0_1] : memref<1x9x512xbf16, #tpu.memory_space<vmem>>, vector<1x9x512xbf16>
    %1 = vector.shape_cast %0 : vector<1x9x512xbf16> to vector<9x512xbf16>
    %c0_2 = arith.constant 0 : index
    %c0_3 = arith.constant 0 : index
    %2 = vector.load %arg3[%c0_2, %c0_3] : memref<512x512xbf16, #tpu.memory_space<vmem>>, vector<512x512xbf16>
    %cst = arith.constant dense<0.000000e+00> : vector<512x9xf32>
    %3 = tpu.matmul %2, %1, %cst {dimension_numbers = #tpu.dot_dimension_numbers<[1], [1], [0], [0], [0, 0, 1, 0], [], []>} : vector<512x512xbf16>, vector<9x512xbf16>, vector<512x9xf32> -> vector<512x9xf32>
    %4 = vector.extract_strided_slice %3 {offsets = [0, 0], sizes = [256, 9], strides = [1, 1]} : vector<512x9xf32> to vector<256x9xf32>
    %5 = vector.extract_strided_slice %3 {offsets = [256, 0], sizes = [256, 9], strides = [1, 1]} : vector<512x9xf32> to vector<256x9xf32>
    %6 = tpu.iota {dimensions = array<i32: 0>} : vector<256x9xi32>
    %c0_i32 = arith.constant 0 : i32
    %7 = vector.broadcast %c0_i32 : i32 to vector<256x9xi32>
    %8 = arith.cmpi eq, %6, %7 : vector<256x9xi32>
    %cst_4 = arith.constant 0.000000e+00 : f32
    %9 = vector.broadcast %cst_4 : f32 to vector<256x9xf32>
    %10 = arith.select %8, %9, %5 : vector<256x9xi1>, vector<256x9xf32>
    %11 = arith.mulf %4, %4 : vector<256x9xf32>
    %12 = arith.mulf %10, %10 : vector<256x9xf32>
    %13 = arith.addf %11, %12 : vector<256x9xf32>
    %14 = math.sqrt %13 : vector<256x9xf32>
    %c0_5 = arith.constant 0 : index
    %c0_6 = arith.constant 0 : index
    %c0_7 = arith.constant 0 : index
    %15 = vector.load %arg4[%c0_5, %c0_6, %c0_7] : memref<1x257x9xf32, #tpu.memory_space<vmem>>, vector<1x256x9xf32>
    %16 = vector.shape_cast %15 : vector<1x256x9xf32> to vector<256x9xf32>
    %17 = vector.shape_cast %14 : vector<256x9xf32> to vector<1x256x9xf32>
    tpu.vector_store %arg4[%c0_5, %c0_6, %c0_7], %17 {strides = array<i32>} : memref<1x257x9xf32, #tpu.memory_space<vmem>>, vector<1x256x9xf32>,
    %18 = vector.extract_strided_slice %5 {offsets = [0, 0], sizes = [1, 9], strides = [1, 1]} : vector<256x9xf32> to vector<1x9xf32>
    %19 = math.absf %18 : vector<1x9xf32>
    %c0_8 = arith.constant 0 : index
    %c256 = arith.constant 256 : index
    %c0_9 = arith.constant 0 : index
    %20 = vector.load %arg4[%c0_8, %c256, %c0_9] : memref<1x257x9xf32, #tpu.memory_space<vmem>>, vector<1x1x9xf32>
    %21 = vector.shape_cast %20 : vector<1x1x9xf32> to vector<1x9xf32>
    %22 = vector.shape_cast %19 : vector<1x9xf32> to vector<1x1x9xf32>
    tpu.vector_store %arg4[%c0_8, %c256, %c0_9], %22 {strides = array<i32>} : memref<1x257x9xf32, #tpu.memory_space<vmem>>, vector<1x1x9xf32>,
    return
  }
  func.func @transform_0(%arg0: i32, %arg1: i32) -> (i32, i32, i32) {
    %c0_i32 = arith.constant 0 : i32
    %c0_i32_0 = arith.constant 0 : i32
    return %arg0, %arg1, %c0_i32 : i32, i32, i32
  }
  func.func @transform_1(%arg0: i32, %arg1: i32) -> (i32, i32) {
    %c0_i32 = arith.constant 0 : i32
    %c0_i32_0 = arith.constant 0 : i32
    %c0_i32_1 = arith.constant 0 : i32
    return %c0_i32, %c0_i32_0 : i32, i32
  }
  func.func @transform_2(%arg0: i32, %arg1: i32) -> (i32, i32, i32) {
    %c0_i32 = arith.constant 0 : i32
    %c0_i32_0 = arith.constant 0 : i32
    return %arg0, %c0_i32, %arg1 : i32, i32, i32
  }
}

</mosaic_0001>

<llo_original>
// kernel: feat_pipeline.1
$region0: #{feat_pipeline.1}
  #allocation0 [shape = 'u32[]', space=smem, size = 0x4, offset = 0x4, fixed_abs, tag = 'smem constant byte address 0x4 - core index']
  #allocation1 [shape = 'u32[144,128]{1,0:T(1,128)}', space=vmem, size = 0x12000, scoped, tag = 'internal scratch']
  %s0 = inlined_call_operand.vmem [shape: bf16[2,9,512], index: 0, kind: input, shape index: {}]
  %s1 = inlined_call_operand.vmem [shape: bf16[512,512], index: 1, kind: input, shape index: {}]
  %s2 = inlined_call_operand.vmem [shape: f32[2,257,9], index: 2, kind: output, shape index: {}]
  %s3 = sld [smem:[#allocation0]]
  $region41: #{feat_pipeline.1} parent=0
    _
  %s5 = ssub.s32 1, %s3
  %s6 = scalar_select 0, %s5, %s3
  loop: start=0, step=1, limit=4
  $region2: #{feat_pipeline.1} parent=0 // loop_pre_header
    _
  $region3: #{feat_pipeline.1} parent=0 // loop_header
    %s8 = sphi 0, %s12
    %p9 = scmp.ge.s32.totalorder %s8, 4
    %s15 = sphi 0, %s27
    %s16 = sphi 0, %s23
    %s17 = sphi 0, %s15
    %s18 = sphi 0, %s16
    %s19 = sphi 0, %s17
    %s20 = sphi 0, %s18
    %s32 = sphi 0, %s34
    %s35 = sphi 0, %s32
    %s36 = sphi 0, %s35
    %s52 = sphi 0, %s36
    %s56 = sphi 0, %s56
    %s58 = sphi 0, %s56
    %s59 = sphi 0, %s58
    %s73 = sphi 0, %s59
    %s81 = sphi 0, %s83
    %s84 = sphi 0, %s81
    %s85 = sphi 0, %s84
    %s101 = sphi 0, %s85
  $region4: #{feat_pipeline.1} parent=0 // loop_header_branch
    %11 = sbr.rel (%p9) target = $region8
  $region5: #{feat_pipeline.1} parent=0 // loop_body
    %s13 = ssub.s32 %s8, 1
    %s14 = ssub.s32 %s8, 2
    %s21 = sadd.s32 1, %s16
    %p22 = scmp.ge.s32.totalorder %s21, 1
    %s23 = scalar_select %p22, 0, %s21
    %s24 = sadd.s32 1, %s15
    %s25 = scalar_select %p22, %s24, %s15
    %p26 = scmp.ge.s32.totalorder %s25, 2
    %s27 = scalar_select %p26, 0, %s25
    %s28 = ssub.s32 %s15, %s27
    %s29 = ssub.s32 %s16, %s23
    %s30 = sor.u32 %s28, %s29
    %p31 = scmp.eq.s32.totalorder %s30, 0
    %s33 = sadd.s32 %s32, 1
    %s34 = scalar_select %p31, %s32, %s33
    %p37 = pneg %p31
    %p38 = scmp.eq.s32.totalorder %s8, 1
    %p39 = por %p37, %p38
    %p40 = scmp.ne.s32.totalorder %s32, %s35
    %p41 = scmp.eq.s32.totalorder %s8, 0
    %p42 = por %p40, %p41
    %p43 = scmp.ne.s32.totalorder %s32, %s35
    %p44 = scmp.eq.s32.totalorder %s13, 1
    %p45 = por %p43, %p44
    %p46 = scmp.ne.s32.totalorder %s35, %s36
    %p47 = scmp.eq.s32.totalorder %s13, 0
    %p48 = por %p46, %p47
    %p49 = scmp.ne.s32.totalorder %s35, %s36
    %p50 = scmp.eq.s32.totalorder %s14, 1
    %p51 = por %p49, %p50
    %p53 = scmp.ne.s32.totalorder %s36, %s52
    %p54 = scmp.eq.s32.totalorder %s14, 0
    %p55 = por %p53, %p54
    %s57 = sadd.s32 %s56, 1
    %p60 = scmp.eq.s32.totalorder %s8, 1
    %p61 = scmp.ne.s32.totalorder %s56, %s58
    %p62 = scmp.eq.s32.totalorder %s8, 0
    %p63 = por %p61, %p62
    %p64 = scmp.ne.s32.totalorder %s56, %s58
    %p65 = scmp.eq.s32.totalorder %s13, 1
    %p66 = por %p64, %p65
    %p67 = scmp.ne.s32.totalorder %s58, %s59
    %p68 = scmp.eq.s32.totalorder %s13, 0
    %p69 = por %p67, %p68
    %p70 = scmp.ne.s32.totalorder %s58, %s59
    %p71 = scmp.eq.s32.totalorder %s14, 1
    %p72 = por %p70, %p71
    %p74 = scmp.ne.s32.totalorder %s59, %s73
    %p75 = scmp.eq.s32.totalorder %s14, 0
    %p76 = por %p74, %p75
    %s77 = ssub.s32 %s15, %s27
    %s78 = ssub.s32 %s16, %s23
    %s79 = sor.u32 %s77, %s78
    %p80 = scmp.eq.s32.totalorder %s79, 0
    %s82 = sadd.s32 %s81, 1
    %s83 = scalar_select %p80, %s81, %s82
    %p86 = pneg %p80
    %p87 = scmp.eq.s32.totalorder %s8, 1
    %p88 = por %p86, %p87
    %p89 = scmp.ne.s32.totalorder %s81, %s84
    %p90 = scmp.eq.s32.totalorder %s8, 0
    %p91 = por %p89, %p90
    %p92 = scmp.ne.s32.totalorder %s81, %s84
    %p93 = scmp.eq.s32.totalorder %s13, 1
    %p94 = por %p92, %p93
    %p95 = scmp.ne.s32.totalorder %s84, %s85
    %p96 = scmp.eq.s32.totalorder %s13, 0
    %p97 = por %p95, %p96
    %p98 = scmp.ne.s32.totalorder %s84, %s85
    %p99 = scmp.eq.s32.totalorder %s14, 1
    %p100 = por %p98, %p99
    %p102 = scmp.ne.s32.totalorder %s85, %s101
    %p103 = scmp.eq.s32.totalorder %s14, 0
    %p104 = por %p102, %p103
    %p105 = scmp.le.s32.totalorder 1, %s8
    %p106 = scmp.lt.s32.totalorder %s8, 3
    %p107 = pnand %p105, %p106
    %p108 = pneg %p107
    // Predicated region
    $region9: #{feat_pipeline.1} parent=5 // pred_check
      _
    $region10: #{feat_pipeline.1} parent=5 // pred_check_branch
      %110 = sbr.rel (%p107) target = $region12
    $region11: #{feat_pipeline.1} parent=5 // pred_region
      %s111 = ssub.s32 %s8, 1
      // Predicated region
      $region13: #{feat_pipeline.1} parent=11 // pred_check
        %p112 = pneg %p69
      $region14: #{feat_pipeline.1} parent=11 // pred_check_branch
        %114 = sbr.rel (%p112) target = $region16
      $region15: #{feat_pipeline.1} parent=11 // pred_region
        _
      $region16: #{feat_pipeline.1} parent=11 // pred_fallthru
        _
    $region12: #{feat_pipeline.1} parent=5 // pred_fallthru
      _
    %p115 = scmp.lt.s32.totalorder %s8, 2
    // Predicated region
    $region17: #{feat_pipeline.1} parent=5 // pred_check
      %p116 = pneg %p115
    $region18: #{feat_pipeline.1} parent=5 // pred_check_branch
      %118 = sbr.rel (%p116) target = $region20
    $region19: #{feat_pipeline.1} parent=5 // pred_region
      // Predicated region
      $region21: #{feat_pipeline.1} parent=19 // pred_check
        %p119 = pneg %p42
      $region22: #{feat_pipeline.1} parent=19 // pred_check_branch
        %121 = sbr.rel (%p119) target = $region24
      $region23: #{feat_pipeline.1} parent=19 // pred_region
        %s122 = smul.u32 2, %s16
        %p123 = scmp.lt.s32.totalorder %s15, 1
        %s124 = scalar_select %p123, %s15, 1
        %p125 = scmp.lt.s32.totalorder %s122, 1
        %s126 = scalar_select %p125, %s122, 1
        %s127 = smul.addr %s126, 4
        %s128 = smul.addr %s124, 8
        %s129 = sadd.s32 %s127, %s128
        %s130 = smul.addr %s129, 4
        %s131 = scalar_lea.vmem %s0, %s130
        %s132 = smul.u32 2, %s16
      $region24: #{feat_pipeline.1} parent=19 // pred_fallthru
        _
    $region20: #{feat_pipeline.1} parent=5 // pred_fallthru
      _
    %p133 = scmp.le.s32.totalorder 1, %s8
    %p134 = scmp.lt.s32.totalorder %s8, 3
    %p135 = pnand %p133, %p134
    %p136 = pneg %p135
    // Predicated region
    $region25: #{feat_pipeline.1} parent=5 // pred_check
      _
    $region26: #{feat_pipeline.1} parent=5 // pred_check_branch
      %138 = sbr.rel (%p135) target = $region28
    $region27: #{feat_pipeline.1} parent=5 // pred_region
      %s139 = ssub.s32 %s8, 1
      %s140 = smul.u32 2, %s18
      %p141 = scmp.lt.s32.totalorder %s17, 1
      %s142 = scalar_select %p141, %s17, 1
      %p143 = scmp.lt.s32.totalorder %s140, 1
      %s144 = scalar_select %p143, %s140, 1
      %s145 = smul.addr %s144, 4
      %s146 = smul.addr %s142, 8
      %s147 = sadd.s32 %s145, %s146
      %s148 = smul.addr %s147, 4
      %s149 = scalar_lea.vmem %s0, %s148
      %p150 = pneg %p48
      %p151 = pneg %p45
      %p152 = pneg %p69
      %p153 = pneg %p66
      %p154 = pneg %p97
      %p155 = pneg %p94
      %p156 = scmp.lt.s32.totalorder %s17, 1
      %s157 = scalar_select %p156, %s17, 1
      %p158 = scmp.lt.s32.totalorder %s18, 0
      %s159 = scalar_select %p158, %s18, 0
      %s160 = smul.addr %s157, 33
      %s161 = sadd.s32 %s159, %s160
      %s162 = smul.addr %s161, 8
      %s163 = scalar_lea.vmem %s2, %s162
      %s164 = smul.u32 2, %s18
      %p165 = scmp.lt.s32.totalorder %s17, 1
      %s166 = scalar_select %p165, %s17, 1
      %p167 = scmp.lt.s32.totalorder %s164, 1
      %s168 = scalar_select %p167, %s164, 1
      %s169 = smul.addr %s168, 4
      %s170 = smul.addr %s166, 8
      %s171 = sadd.s32 %s169, %s170
      %s172 = smul.addr %s171, 4
      %s173 = scalar_lea.vmem %s0, %s172
      %s174 = smul.u32 2, %s18
      %p175 = scmp.lt.s32.totalorder %s17, 1
      %s176 = scalar_select %p175, %s17, 1
      %p177 = scmp.lt.s32.totalorder %s18, 0
      %s178 = scalar_select %p177, %s18, 0
      %s179 = smul.addr %s176, 33
      %s180 = sadd.s32 %s178, %s179
      %s181 = smul.addr %s180, 8
      %s182 = scalar_lea.vmem %s2, %s181
      %v184 = vld [vmem:[%s173] sm:$0xff]
      %v185 = vld [vmem:[%s173 + $0x8] sm:$0xff]
      %v186 = vld [vmem:[%s173 + $0x10] sm:$0x11]
      %v187 = vld [vmem:[%s173 + $0x18] sm:$0x11]
      %v188 = vld [vmem:[%s1] sm:$0xff]
      %v189 = vld [vmem:[%s1 + $0x8] sm:$0xff]
      %v190 = vld [vmem:[%s1 + $0x10] sm:$0xff]
      %v191 = vld [vmem:[%s1 + $0x18] sm:$0xff]
      %v192 = vld [vmem:[%s1 + $0x20] sm:$0xff]
      %v193 = vld [vmem:[%s1 + $0x28] sm:$0xff]
      %v194 = vld [vmem:[%s1 + $0x30] sm:$0xff]
      %v195 = vld [vmem:[%s1 + $0x38] sm:$0xff]
      %v196 = vld [vmem:[%s1 + $0x40] sm:$0xff]
      %v197 = vld [vmem:[%s1 + $0x48] sm:$0xff]
      %v198 = vld [vmem:[%s1 + $0x50] sm:$0xff]
      %v199 = vld [vmem:[%s1 + $0x58] sm:$0xff]
      %v200 = vld [vmem:[%s1 + $0x60] sm:$0xff]
      %v201 = vld [vmem:[%s1 + $0x68] sm:$0xff]
      %v202 = vld [vmem:[%s1 + $0x70] sm:$0xff]
      %v203 = vld [vmem:[%s1 + $0x78] sm:$0xff]
      %v204 = vld [vmem:[%s1 + $0x80] sm:$0xff]
      %v205 = vld [vmem:[%s1 + $0x88] sm:$0xff]
      %v206 = vld [vmem:[%s1 + $0x90] sm:$0xff]
      %v207 = vld [vmem:[%s1 + $0x98] sm:$0xff]
      %v208 = vld [vmem:[%s1 + $0xa0] sm:$0xff]
      %v209 = vld [vmem:[%s1 + $0xa8] sm:$0xff]
      %v210 = vld [vmem:[%s1 + $0xb0] sm:$0xff]
      %v211 = vld [vmem:[%s1 + $0xb8] sm:$0xff]
      %v212 = vld [vmem:[%s1 + $0xc0] sm:$0xff]
      %v213 = vld [vmem:[%s1 + $0xc8] sm:$0xff]
      %v214 = vld [vmem:[%s1 + $0xd0] sm:$0xff]
      %v215 = vld [vmem:[%s1 + $0xd8] sm:$0xff]
      %v216 = vld [vmem:[%s1 + $0xe0] sm:$0xff]
      %v217 = vld [vmem:[%s1 + $0xe8] sm:$0xff]
      %v218 = vld [vmem:[%s1 + $0xf0] sm:$0xff]
      %v219 = vld [vmem:[%s1 + $0xf8] sm:$0xff]
      %v220 = vld [vmem:[%s1 + $0x100] sm:$0xff]
      %v221 = vld [vmem:[%s1 + $0x108] sm:$0xff]
      %v222 = vld [vmem:[%s1 + $0x110] sm:$0xff]
      %v223 = vld [vmem:[%s1 + $0x118] sm:$0xff]
      %v224 = vld [vmem:[%s1 + $0x120] sm:$0xff]
      %v225 = vld [vmem:[%s1 + $0x128] sm:$0xff]
      %v226 = vld [vmem:[%s1 + $0x130] sm:$0xff]
      %v227 = vld [vmem:[%s1 + $0x138] sm:$0xff]
      %v228 = vld [vmem:[%s1 + $0x140] sm:$0xff]
      %v229 = vld [vmem:[%s1 + $0x148] sm:$0xff]
      %v230 = vld [vmem:[%s1 + $0x150] sm:$0xff]
      %v231 = vld [vmem:[%s1 + $0x158] sm:$0xff]
      %v232 = vld [vmem:[%s1 + $0x160] sm:$0xff]
      %v233 = vld [vmem:[%s1 + $0x168] sm:$0xff]
      %v234 = vld [vmem:[%s1 + $0x170] sm:$0xff]
      %v235 = vld [vmem:[%s1 + $0x178] sm:$0xff]
      %v236 = vld [vmem:[%s1 + $0x180] sm:$0xff]
      %v237 = vld [vmem:[%s1 + $0x188] sm:$0xff]
      %v238 = vld [vmem:[%s1 + $0x190] sm:$0xff]
      %v239 = vld [vmem:[%s1 + $0x198] sm:$0xff]
      %v240 = vld [vmem:[%s1 + $0x1a0] sm:$0xff]
      %v241 = vld [vmem:[%s1 + $0x1a8] sm:$0xff]
      %v242 = vld [vmem:[%s1 + $0x1b0] sm:$0xff]
      %v243 = vld [vmem:[%s1 + $0x1b8] sm:$0xff]
      %v244 = vld [vmem:[%s1 + $0x1c0] sm:$0xff]
      %v245 = vld [vmem:[%s1 + $0x1c8] sm:$0xff]
      %v246 = vld [vmem:[%s1 + $0x1d0] sm:$0xff]
      %v247 = vld [vmem:[%s1 + $0x1d8] sm:$0xff]
      %v248 = vld [vmem:[%s1 + $0x1e0] sm:$0xff]
      %v249 = vld [vmem:[%s1 + $0x1e8] sm:$0xff]
      %v250 = vld [vmem:[%s1 + $0x1f0] sm:$0xff]
      %v251 = vld [vmem:[%s1 + $0x1f8] sm:$0xff]
      %v252 = vld [vmem:[%s1 + $0x200] sm:$0xff]
      %v253 = vld [vmem:[%s1 + $0x208] sm:$0xff]
      %v254 = vld [vmem:[%s1 + $0x210] sm:$0xff]
      %v255 = vld [vmem:[%s1 + $0x218] sm:$0xff]
      %v256 = vld [vmem:[%s1 + $0x220] sm:$0xff]
      %v257 = vld [vmem:[%s1 + $0x228] sm:$0xff]
      %v258 = vld [vmem:[%s1 + $0x230] sm:$0xff]
      %v259 = vld [vmem:[%s1 + $0x238] sm:$0xff]
      %v260 = vld [vmem:[%s1 + $0x240] sm:$0xff]
      %v261 = vld [vmem:[%s1 + $0x248] sm:$0xff]
      %v262 = vld [vmem:[%s1 + $0x250] sm:$0xff]
      %v263 = vld [vmem:[%s1 + $0x258] sm:$0xff]
      %v264 = vld [vmem:[%s1 + $0x260] sm:$0xff]
      %v265 = vld [vmem:[%s1 + $0x268] sm:$0xff]
      %v266 = vld [vmem:[%s1 + $0x270] sm:$0xff]
      %v267 = vld [vmem:[%s1 + $0x278] sm:$0xff]
      %v268 = vld [vmem:[%s1 + $0x280] sm:$0xff]
      %v269 = vld [vmem:[%s1 + $0x288] sm:$0xff]
      %v270 = vld [vmem:[%s1 + $0x290] sm:$0xff]
      %v271 = vld [vmem:[%s1 + $0x298] sm:$0xff]
      %v272 = vld [vmem:[%s1 + $0x2a0] sm:$0xff]
      %v273 = vld [vmem:[%s1 + $0x2a8] sm:$0xff]
      %v274 = vld [vmem:[%s1 + $0x2b0] sm:$0xff]
      %v275 = vld [vmem:[%s1 + $0x2b8] sm:$0xff]
      %v276 = vld [vmem:[%s1 + $0x2c0] sm:$0xff]
      %v277 = vld [vmem:[%s1 + $0x2c8] sm:$0xff]
      %v278 = vld [vmem:[%s1 + $0x2d0] sm:$0xff]
      %v279 = vld [vmem:[%s1 + $0x2d8] sm:$0xff]
      %v280 = vld [vmem:[%s1 + $0x2e0] sm:$0xff]
      %v281 = vld [vmem:[%s1 + $0x2e8] sm:$0xff]
      %v282 = vld [vmem:[%s1 + $0x2f0] sm:$0xff]
      %v283 = vld [vmem:[%s1 + $0x2f8] sm:$0xff]
      %v284 = vld [vmem:[%s1 + $0x300] sm:$0xff]
      %v285 = vld [vmem:[%s1 + $0x308] sm:$0xff]
      %v286 = vld [vmem:[%s1 + $0x310] sm:$0xff]
      %v287 = vld [vmem:[%s1 + $0x318] sm:$0xff]
      %v288 = vld [vmem:[%s1 + $0x320] sm:$0xff]
      %v289 = vld [vmem:[%s1 + $0x328] sm:$0xff]
      %v290 = vld [vmem:[%s1 + $0x330] sm:$0xff]
      %v291 = vld [vmem:[%s1 + $0x338] sm:$0xff]
      %v292 = vld [vmem:[%s1 + $0x340] sm:$0xff]
      %v293 = vld [vmem:[%s1 + $0x348] sm:$0xff]
      %v294 = vld [vmem:[%s1 + $0x350] sm:$0xff]
      %v295 = vld [vmem:[%s1 + $0x358] sm:$0xff]
      %v296 = vld [vmem:[%s1 + $0x360] sm:$0xff]
      %v297 = vld [vmem:[%s1 + $0x368] sm:$0xff]
      %v298 = vld [vmem:[%s1 + $0x370] sm:$0xff]
      %v299 = vld [vmem:[%s1 + $0x378] sm:$0xff]
      %v300 = vld [vmem:[%s1 + $0x380] sm:$0xff]
      %v301 = vld [vmem:[%s1 + $0x388] sm:$0xff]
      %v302 = vld [vmem:[%s1 + $0x390] sm:$0xff]
      %v303 = vld [vmem:[%s1 + $0x398] sm:$0xff]
      %v304 = vld [vmem:[%s1 + $0x3a0] sm:$0xff]
      %v305 = vld [vmem:[%s1 + $0x3a8] sm:$0xff]
      %v306 = vld [vmem:[%s1 + $0x3b0] sm:$0xff]
      %v307 = vld [vmem:[%s1 + $0x3b8] sm:$0xff]
      %v308 = vld [vmem:[%s1 + $0x3c0] sm:$0xff]
      %v309 = vld [vmem:[%s1 + $0x3c8] sm:$0xff]
      %v310 = vld [vmem:[%s1 + $0x3d0] sm:$0xff]
      %v311 = vld [vmem:[%s1 + $0x3d8] sm:$0xff]
      %v312 = vld [vmem:[%s1 + $0x3e0] sm:$0xff]
      %v313 = vld [vmem:[%s1 + $0x3e8] sm:$0xff]
      %v314 = vld [vmem:[%s1 + $0x3f0] sm:$0xff]
      %v315 = vld [vmem:[%s1 + $0x3f8] sm:$0xff]
      %v444 = vunpack.c.l.b16 %v188
      %v445 = vunpack.c.h.b16 %v188
      %v446 = vunpack.c.l.b16 %v189
      %v447 = vunpack.c.h.b16 %v189
      %v448 = vunpack.c.l.b16 %v190
      %v449 = vunpack.c.h.b16 %v190
      %v450 = vunpack.c.l.b16 %v191
      %v451 = vunpack.c.h.b16 %v191
      %v452 = vunpack.c.l.b16 %v192
      %v453 = vunpack.c.h.b16 %v192
      %v454 = vunpack.c.l.b16 %v193
      %v455 = vunpack.c.h.b16 %v193
      %v456 = vunpack.c.l.b16 %v194
      %v457 = vunpack.c.h.b16 %v194
      %v458 = vunpack.c.l.b16 %v195
      %v459 = vunpack.c.h.b16 %v195
      %v460 = vunpack.c.l.b16 %v196
      %v461 = vunpack.c.h.b16 %v196
      %v462 = vunpack.c.l.b16 %v197
      %v463 = vunpack.c.h.b16 %v197
      %v464 = vunpack.c.l.b16 %v198
      %v465 = vunpack.c.h.b16 %v198
      %v466 = vunpack.c.l.b16 %v199
      %v467 = vunpack.c.h.b16 %v199
      %v468 = vunpack.c.l.b16 %v200
      %v469 = vunpack.c.h.b16 %v200
      %v470 = vunpack.c.l.b16 %v201
      %v471 = vunpack.c.h.b16 %v201
      %v472 = vunpack.c.l.b16 %v202
      %v473 = vunpack.c.h.b16 %v202
      %v474 = vunpack.c.l.b16 %v203
      %v475 = vunpack.c.h.b16 %v203
      %v476 = vunpack.c.l.b16 %v204
      %v477 = vunpack.c.h.b16 %v204
      %v478 = vunpack.c.l.b16 %v205
      %v479 = vunpack.c.h.b16 %v205
      %v480 = vunpack.c.l.b16 %v206
      %v481 = vunpack.c.h.b16 %v206
      %v482 = vunpack.c.l.b16 %v207
      %v483 = vunpack.c.h.b16 %v207
      %v484 = vunpack.c.l.b16 %v208
      %v485 = vunpack.c.h.b16 %v208
      %v486 = vunpack.c.l.b16 %v209
      %v487 = vunpack.c.h.b16 %v209
      %v488 = vunpack.c.l.b16 %v210
      %v489 = vunpack.c.h.b16 %v210
      %v490 = vunpack.c.l.b16 %v211
      %v491 = vunpack.c.h.b16 %v211
      %v492 = vunpack.c.l.b16 %v212
      %v493 = vunpack.c.h.b16 %v212
      %v494 = vunpack.c.l.b16 %v213
      %v495 = vunpack.c.h.b16 %v213
      %v496 = vunpack.c.l.b16 %v214
      %v497 = vunpack.c.h.b16 %v214
      %v498 = vunpack.c.l.b16 %v215
      %v499 = vunpack.c.h.b16 %v215
      %v500 = vunpack.c.l.b16 %v216
      %v501 = vunpack.c.h.b16 %v216
      %v502 = vunpack.c.l.b16 %v217
      %v503 = vunpack.c.h.b16 %v217
      %v504 = vunpack.c.l.b16 %v218
      %v505 = vunpack.c.h.b16 %v218
      %v506 = vunpack.c.l.b16 %v219
      %v507 = vunpack.c.h.b16 %v219
      %v508 = vunpack.c.l.b16 %v220
      %v509 = vunpack.c.h.b16 %v220
      %v510 = vunpack.c.l.b16 %v221
      %v511 = vunpack.c.h.b16 %v221
      %v512 = vunpack.c.l.b16 %v222
      %v513 = vunpack.c.h.b16 %v222
      %v514 = vunpack.c.l.b16 %v223
      %v515 = vunpack.c.h.b16 %v223
      %v516 = vunpack.c.l.b16 %v224
      %v517 = vunpack.c.h.b16 %v224
      %v518 = vunpack.c.l.b16 %v225
      %v519 = vunpack.c.h.b16 %v225
      %v520 = vunpack.c.l.b16 %v226
      %v521 = vunpack.c.h.b16 %v226
      %v522 = vunpack.c.l.b16 %v227
      %v523 = vunpack.c.h.b16 %v227
      %v524 = vunpack.c.l.b16 %v228
      %v525 = vunpack.c.h.b16 %v228
      %v526 = vunpack.c.l.b16 %v229
      %v527 = vunpack.c.h.b16 %v229
      %v528 = vunpack.c.l.b16 %v230
      %v529 = vunpack.c.h.b16 %v230
      %v530 = vunpack.c.l.b16 %v231
      %v531 = vunpack.c.h.b16 %v231
      %v532 = vunpack.c.l.b16 %v232
      %v533 = vunpack.c.h.b16 %v232
      %v534 = vunpack.c.l.b16 %v233
      %v535 = vunpack.c.h.b16 %v233
      %v536 = vunpack.c.l.b16 %v234
      %v537 = vunpack.c.h.b16 %v234
      %v538 = vunpack.c.l.b16 %v235
      %v539 = vunpack.c.h.b16 %v235
      %v540 = vunpack.c.l.b16 %v236
      %v541 = vunpack.c.h.b16 %v236
      %v542 = vunpack.c.l.b16 %v237
      %v543 = vunpack.c.h.b16 %v237
      %v544 = vunpack.c.l.b16 %v238
      %v545 = vunpack.c.h.b16 %v238
      %v546 = vunpack.c.l.b16 %v239
      %v547 = vunpack.c.h.b16 %v239
      %v548 = vunpack.c.l.b16 %v240
      %v549 = vunpack.c.h.b16 %v240
      %v550 = vunpack.c.l.b16 %v241
      %v551 = vunpack.c.h.b16 %v241
      %v552 = vunpack.c.l.b16 %v242
      %v553 = vunpack.c.h.b16 %v242
      %v554 = vunpack.c.l.b16 %v243
      %v555 = vunpack.c.h.b16 %v243
      %v556 = vunpack.c.l.b16 %v244
      %v557 = vunpack.c.h.b16 %v244
      %v558 = vunpack.c.l.b16 %v245
      %v559 = vunpack.c.h.b16 %v245
      %v560 = vunpack.c.l.b16 %v246
      %v561 = vunpack.c.h.b16 %v246
      %v562 = vunpack.c.l.b16 %v247
      %v563 = vunpack.c.h.b16 %v247
      %v564 = vunpack.c.l.b16 %v248
      %v565 = vunpack.c.h.b16 %v248
      %v566 = vunpack.c.l.b16 %v249
      %v567 = vunpack.c.h.b16 %v249
      %v568 = vunpack.c.l.b16 %v250
      %v569 = vunpack.c.h.b16 %v250
      %v570 = vunpack.c.l.b16 %v251
      %v571 = vunpack.c.h.b16 %v251
      %v572 = vunpack.c.l.b16 %v252
      %v573 = vunpack.c.h.b16 %v252
      %v574 = vunpack.c.l.b16 %v253
      %v575 = vunpack.c.h.b16 %v253
      %v576 = vunpack.c.l.b16 %v254
      %v577 = vunpack.c.h.b16 %v254
      %v578 = vunpack.c.l.b16 %v255
      %v579 = vunpack.c.h.b16 %v255
      %v580 = vunpack.c.l.b16 %v256
      %v581 = vunpack.c.h.b16 %v256
      %v582 = vunpack.c.l.b16 %v257
      %v583 = vunpack.c.h.b16 %v257
      %v584 = vunpack.c.l.b16 %v258
      %v585 = vunpack.c.h.b16 %v258
      %v586 = vunpack.c.l.b16 %v259
      %v587 = vunpack.c.h.b16 %v259
      %v588 = vunpack.c.l.b16 %v260
      %v589 = vunpack.c.h.b16 %v260
      %v590 = vunpack.c.l.b16 %v261
      %v591 = vunpack.c.h.b16 %v261
      %v592 = vunpack.c.l.b16 %v262
      %v593 = vunpack.c.h.b16 %v262
      %v594 = vunpack.c.l.b16 %v263
      %v595 = vunpack.c.h.b16 %v263
      %v596 = vunpack.c.l.b16 %v264
      %v597 = vunpack.c.h.b16 %v264
      %v598 = vunpack.c.l.b16 %v265
      %v599 = vunpack.c.h.b16 %v265
      %v600 = vunpack.c.l.b16 %v266
      %v601 = vunpack.c.h.b16 %v266
      %v602 = vunpack.c.l.b16 %v267
      %v603 = vunpack.c.h.b16 %v267
      %v604 = vunpack.c.l.b16 %v268
      %v605 = vunpack.c.h.b16 %v268
      %v606 = vunpack.c.l.b16 %v269
      %v607 = vunpack.c.h.b16 %v269
      %v608 = vunpack.c.l.b16 %v270
      %v609 = vunpack.c.h.b16 %v270
      %v610 = vunpack.c.l.b16 %v271
      %v611 = vunpack.c.h.b16 %v271
      %v612 = vunpack.c.l.b16 %v272
      %v613 = vunpack.c.h.b16 %v272
      %v614 = vunpack.c.l.b16 %v273
      %v615 = vunpack.c.h.b16 %v273
      %v616 = vunpack.c.l.b16 %v274
      %v617 = vunpack.c.h.b16 %v274
      %v618 = vunpack.c.l.b16 %v275
      %v619 = vunpack.c.h.b16 %v275
      %v620 = vunpack.c.l.b16 %v276
      %v621 = vunpack.c.h.b16 %v276
      %v622 = vunpack.c.l.b16 %v277
      %v623 = vunpack.c.h.b16 %v277
      %v624 = vunpack.c.l.b16 %v278
      %v625 = vunpack.c.h.b16 %v278
      %v626 = vunpack.c.l.b16 %v279
      %v627 = vunpack.c.h.b16 %v279
      %v628 = vunpack.c.l.b16 %v280
      %v629 = vunpack.c.h.b16 %v280
      %v630 = vunpack.c.l.b16 %v281
      %v631 = vunpack.c.h.b16 %v281
      %v632 = vunpack.c.l.b16 %v282
      %v633 = vunpack.c.h.b16 %v282
      %v634 = vunpack.c.l.b16 %v283
      %v635 = vunpack.c.h.b16 %v283
      %v636 = vunpack.c.l.b16 %v284
      %v637 = vunpack.c.h.b16 %v284
      %v638 = vunpack.c.l.b16 %v285
      %v639 = vunpack.c.h.b16 %v285
      %v640 = vunpack.c.l.b16 %v286
      %v641 = vunpack.c.h.b16 %v286
      %v642 = vunpack.c.l.b16 %v287
      %v643 = vunpack.c.h.b16 %v287
      %v644 = vunpack.c.l.b16 %v288
      %v645 = vunpack.c.h.b16 %v288
      %v646 = vunpack.c.l.b16 %v289
      %v647 = vunpack.c.h.b16 %v289
      %v648 = vunpack.c.l.b16 %v290
      %v649 = vunpack.c.h.b16 %v290
      %v650 = vunpack.c.l.b16 %v291
      %v651 = vunpack.c.h.b16 %v291
      %v652 = vunpack.c.l.b16 %v292
      %v653 = vunpack.c.h.b16 %v292
      %v654 = vunpack.c.l.b16 %v293
      %v655 = vunpack.c.h.b16 %v293
      %v656 = vunpack.c.l.b16 %v294
      %v657 = vunpack.c.h.b16 %v294
      %v658 = vunpack.c.l.b16 %v295
      %v659 = vunpack.c.h.b16 %v295
      %v660 = vunpack.c.l.b16 %v296
      %v661 = vunpack.c.h.b16 %v296
      %v662 = vunpack.c.l.b16 %v297
      %v663 = vunpack.c.h.b16 %v297
      %v664 = vunpack.c.l.b16 %v298
      %v665 = vunpack.c.h.b16 %v298
      %v666 = vunpack.c.l.b16 %v299
      %v667 = vunpack.c.h.b16 %v299
      %v668 = vunpack.c.l.b16 %v300
      %v669 = vunpack.c.h.b16 %v300
      %v670 = vunpack.c.l.b16 %v301
      %v671 = vunpack.c.h.b16 %v301
      %v672 = vunpack.c.l.b16 %v302
      %v673 = vunpack.c.h.b16 %v302
      %v674 = vunpack.c.l.b16 %v303
      %v675 = vunpack.c.h.b16 %v303
      %v676 = vunpack.c.l.b16 %v304
      %v677 = vunpack.c.h.b16 %v304
      %v678 = vunpack.c.l.b16 %v305
      %v679 = vunpack.c.h.b16 %v305
      %v680 = vunpack.c.l.b16 %v306
      %v681 = vunpack.c.h.b16 %v306
      %v682 = vunpack.c.l.b16 %v307
      %v683 = vunpack.c.h.b16 %v307
      %v684 = vunpack.c.l.b16 %v308
      %v685 = vunpack.c.h.b16 %v308
      %v686 = vunpack.c.l.b16 %v309
      %v687 = vunpack.c.h.b16 %v309
      %v688 = vunpack.c.l.b16 %v310
      %v689 = vunpack.c.h.b16 %v310
      %v690 = vunpack.c.l.b16 %v311
      %v691 = vunpack.c.h.b16 %v311
      %v692 = vunpack.c.l.b16 %v312
      %v693 = vunpack.c.h.b16 %v312
      %v694 = vunpack.c.l.b16 %v313
      %v695 = vunpack.c.h.b16 %v313
      %v696 = vunpack.c.l.b16 %v314
      %v697 = vunpack.c.h.b16 %v314
      %v698 = vunpack.c.l.b16 %v315
      %v699 = vunpack.c.h.b16 %v315
      %v700 = vpack.c.b16 %v448, %v444
      %v701 = vpack.c.b16 %v449, %v445
      %v702 = vpack.c.b16 %v450, %v446
      %v703 = vpack.c.b16 %v451, %v447
      %v704 = vpack.c.b16 %v456, %v452
      %v705 = vpack.c.b16 %v457, %v453
      %v706 = vpack.c.b16 %v458, %v454
      %v707 = vpack.c.b16 %v459, %v455
      %v708 = vpack.c.b16 %v464, %v460
      %v709 = vpack.c.b16 %v465, %v461
      %v710 = vpack.c.b16 %v466, %v462
      %v711 = vpack.c.b16 %v467, %v463
      %v712 = vpack.c.b16 %v472, %v468
      %v713 = vpack.c.b16 %v473, %v469
      %v714 = vpack.c.b16 %v474, %v470
      %v715 = vpack.c.b16 %v475, %v471
      %v716 = vpack.c.b16 %v480, %v476
      %v717 = vpack.c.b16 %v481, %v477
      %v718 = vpack.c.b16 %v482, %v478
      %v719 = vpack.c.b16 %v483, %v479
      %v720 = vpack.c.b16 %v488, %v484
      %v721 = vpack.c.b16 %v489, %v485
      %v722 = vpack.c.b16 %v490, %v486
      %v723 = vpack.c.b16 %v491, %v487
      %v724 = vpack.c.b16 %v496, %v492
      %v725 = vpack.c.b16 %v497, %v493
      %v726 = vpack.c.b16 %v498, %v494
      %v727 = vpack.c.b16 %v499, %v495
      %v728 = vpack.c.b16 %v504, %v500
      %v729 = vpack.c.b16 %v505, %v501
      %v730 = vpack.c.b16 %v506, %v502
      %v731 = vpack.c.b16 %v507, %v503
      %v732 = vpack.c.b16 %v512, %v508
      %v733 = vpack.c.b16 %v513, %v509
      %v734 = vpack.c.b16 %v514, %v510
      %v735 = vpack.c.b16 %v515, %v511
      %v736 = vpack.c.b16 %v520, %v516
      %v737 = vpack.c.b16 %v521, %v517
      %v738 = vpack.c.b16 %v522, %v518
      %v739 = vpack.c.b16 %v523, %v519
      %v740 = vpack.c.b16 %v528, %v524
      %v741 = vpack.c.b16 %v529, %v525
      %v742 = vpack.c.b16 %v530, %v526
      %v743 = vpack.c.b16 %v531, %v527
      %v744 = vpack.c.b16 %v536, %v532
      %v745 = vpack.c.b16 %v537, %v533
      %v746 = vpack.c.b16 %v538, %v534
      %v747 = vpack.c.b16 %v539, %v535
      %v748 = vpack.c.b16 %v544, %v540
      %v749 = vpack.c.b16 %v545, %v541
      %v750 = vpack.c.b16 %v546, %v542
      %v751 = vpack.c.b16 %v547, %v543
      %v752 = vpack.c.b16 %v552, %v548
      %v753 = vpack.c.b16 %v553, %v549
      %v754 = vpack.c.b16 %v554, %v550
      %v755 = vpack.c.b16 %v555, %v551
      %v756 = vpack.c.b16 %v560, %v556
      %v757 = vpack.c.b16 %v561, %v557
      %v758 = vpack.c.b16 %v562, %v558
      %v759 = vpack.c.b16 %v563, %v559
      %v760 = vpack.c.b16 %v568, %v564
      %v761 = vpack.c.b16 %v569, %v565
      %v762 = vpack.c.b16 %v570, %v566
      %v763 = vpack.c.b16 %v571, %v567
      %v764 = vpack.c.b16 %v576, %v572
      %v765 = vpack.c.b16 %v577, %v573
      %v766 = vpack.c.b16 %v578, %v574
      %v767 = vpack.c.b16 %v579, %v575
      %v768 = vpack.c.b16 %v584, %v580
      %v769 = vpack.c.b16 %v585, %v581
      %v770 = vpack.c.b16 %v586, %v582
      %v771 = vpack.c.b16 %v587, %v583
      %v772 = vpack.c.b16 %v592, %v588
      %v773 = vpack.c.b16 %v593, %v589
      %v774 = vpack.c.b16 %v594, %v590
      %v775 = vpack.c.b16 %v595, %v591
      %v776 = vpack.c.b16 %v600, %v596
      %v777 = vpack.c.b16 %v601, %v597
      %v778 = vpack.c.b16 %v602, %v598
      %v779 = vpack.c.b16 %v603, %v599
      %v780 = vpack.c.b16 %v608, %v604
      %v781 = vpack.c.b16 %v609, %v605
      %v782 = vpack.c.b16 %v610, %v606
      %v783 = vpack.c.b16 %v611, %v607
      %v784 = vpack.c.b16 %v616, %v612
      %v785 = vpack.c.b16 %v617, %v613
      %v786 = vpack.c.b16 %v618, %v614
      %v787 = vpack.c.b16 %v619, %v615
      %v788 = vpack.c.b16 %v624, %v620
      %v789 = vpack.c.b16 %v625, %v621
      %v790 = vpack.c.b16 %v626, %v622
      %v791 = vpack.c.b16 %v627, %v623
      %v792 = vpack.c.b16 %v632, %v628
      %v793 = vpack.c.b16 %v633, %v629
      %v794 = vpack.c.b16 %v634, %v630
      %v795 = vpack.c.b16 %v635, %v631
      %v796 = vpack.c.b16 %v640, %v636
      %v797 = vpack.c.b16 %v641, %v637
      %v798 = vpack.c.b16 %v642, %v638
      %v799 = vpack.c.b16 %v643, %v639
      %v800 = vpack.c.b16 %v648, %v644
      %v801 = vpack.c.b16 %v649, %v645
      %v802 = vpack.c.b16 %v650, %v646
      %v803 = vpack.c.b16 %v651, %v647
      %v804 = vpack.c.b16 %v656, %v652
      %v805 = vpack.c.b16 %v657, %v653
      %v806 = vpack.c.b16 %v658, %v654
      %v807 = vpack.c.b16 %v659, %v655
      %v808 = vpack.c.b16 %v664, %v660
      %v809 = vpack.c.b16 %v665, %v661
      %v810 = vpack.c.b16 %v666, %v662
      %v811 = vpack.c.b16 %v667, %v663
      %v812 = vpack.c.b16 %v672, %v668
      %v813 = vpack.c.b16 %v673, %v669
      %v814 = vpack.c.b16 %v674, %v670
      %v815 = vpack.c.b16 %v675, %v671
      %v816 = vpack.c.b16 %v680, %v676
      %v817 = vpack.c.b16 %v681, %v677
      %v818 = vpack.c.b16 %v682, %v678
      %v819 = vpack.c.b16 %v683, %v679
      %v820 = vpack.c.b16 %v688, %v684
      %v821 = vpack.c.b16 %v689, %v685
      %v822 = vpack.c.b16 %v690, %v686
      %v823 = vpack.c.b16 %v691, %v687
      %v824 = vpack.c.b16 %v696, %v692
      %v825 = vpack.c.b16 %v697, %v693
      %v826 = vpack.c.b16 %v698, %v694
      %v827 = vpack.c.b16 %v699, %v695
      %v960 = vunpack.c.l.b16 %v184
      %v961 = vunpack.c.h.b16 %v184
      %v962 = vunpack.c.l.b16 %v185
      %v963 = vunpack.c.h.b16 %v185
      %v964 = vunpack.c.l.b16 %v186
      %v965 = vunpack.c.h.b16 %v186
      %v966 = vunpack.c.l.b16 %v187
      %v967 = vunpack.c.h.b16 %v187
      %v968 = vpack.c.b16 %v964, %v960
      %v969 = vpack.c.b16 %v965, %v961
      %v970 = vpack.c.b16 %v966, %v962
      %v971 = vpack.c.b16 %v967, %v963
      %976 = vmatprep.subr.bf16.mxu0 0
      %977 = vmatpush1.bf16.xpose.msra.mxu0 0
      %978 = vmatprep.subr.bf16.mxu0 0
      %979 = vmatpush1.bf16.xpose.msra.mxu0 0
      %980 = vmatprep.subr.bf16.mxu0 0
      %981 = vmatpush1.bf16.xpose.msra.mxu0 0
      %982 = vmatprep.subr.bf16.mxu0 0
      %983 = vmatpush1.bf16.xpose.msra.mxu0 0
      %984 = vmatprep.subr.bf16.mxu0 0
      %985 = vmatpush1.bf16.xpose.msra.mxu0 0
      %986 = vmatprep.subr.bf16.mxu0 0
      %987 = vmatpush1.bf16.xpose.msra.mxu0 0
      %988 = vmatprep.subr.bf16.mxu0 0
      %989 = vmatpush1.bf16.xpose.msra.mxu0 0
      %990 = vmatprep.subr.bf16.mxu0 %v969
      %991 = vmatpush1.bf16.xpose.msra.mxu0 %v968
      %992 = vmatprep.subr.bf16.mxu0 0
      %993 = vmatpush2.bf16.xpose.msra.mxu0 0
      %994 = vmatprep.subr.bf16.mxu0 0
      %995 = vmatpush2.bf16.xpose.msra.mxu0 0
      %996 = vmatprep.subr.bf16.mxu0 0
      %997 = vmatpush2.bf16.xpose.msra.mxu0 0
      %998 = vmatprep.subr.bf16.mxu0 0
      %999 = vmatpush2.bf16.xpose.msra.mxu0 0
      %1000 = vmatprep.subr.bf16.mxu0 0
      %1001 = vmatpush2.bf16.xpose.msra.mxu0 0
      %1002 = vmatprep.subr.bf16.mxu0 0
      %1003 = vmatpush2.bf16.xpose.msra.mxu0 0
      %1004 = vmatprep.subr.bf16.mxu0 0
      %1005 = vmatpush2.bf16.xpose.msra.mxu0 0
      %1006 = vmatprep.subr.bf16.mxu0 0
      %1007 = vmatpush2.bf16.xpose.msra.mxu0 0
      %1008 = vmatprep.mubr.bf16.mxu0 %v701
      %1009 = vmatmul.mubr.bf16.gmra.mxu0 %v700
      %v1010 = vpop.f32.mrf.mxu0
      %v1011 = vadd.f32 0.0, %v1010
      %v1012 = vpop.f32.mrf.mxu0
      %v1013 = vpop.f32.mrf.mxu0
      %v1014 = vadd.f32 0.0, %v1013
      %v1015 = vpop.f32.mrf.mxu0
      %1016 = vmatprep.mubr.bf16.mxu0 %v705
      %1017 = vmatmul.mubr.bf16.gmra.mxu0 %v704
      %v1018 = vpop.f32.mrf.mxu0
      %v1019 = vadd.f32 0.0, %v1018
      %v1020 = vpop.f32.mrf.mxu0
      %v1021 = vpop.f32.mrf.mxu0
      %v1022 = vadd.f32 0.0, %v1021
      %v1023 = vpop.f32.mrf.mxu0
      %1024 = vmatprep.mubr.bf16.mxu0 %v709
      %1025 = vmatmul.mubr.bf16.gmra.mxu0 %v708
      %v1026 = vpop.f32.mrf.mxu0
      %v1027 = vadd.f32 0.0, %v1026
      %v1028 = vpop.f32.mrf.mxu0
      %v1029 = vpop.f32.mrf.mxu0
      %v1030 = vadd.f32 0.0, %v1029
      %v1031 = vpop.f32.mrf.mxu0
      %1032 = vmatprep.mubr.bf16.mxu0 %v713
      %1033 = vmatmul.mubr.bf16.gmra.mxu0 %v712
      %v1034 = vpop.f32.mrf.mxu0
      %v1035 = vadd.f32 0.0, %v1034
      %v1036 = vpop.f32.mrf.mxu0
      %v1037 = vpop.f32.mrf.mxu0
      %v1038 = vadd.f32 0.0, %v1037
      %v1039 = vpop.f32.mrf.mxu0
      %1040 = vmatprep.mubr.bf16.mxu0 %v717
      %1041 = vmatmul.mubr.bf16.gmra.mxu0 %v716
      %v1042 = vpop.f32.mrf.mxu0
      %v1043 = vadd.f32 0.0, %v1042
      %v1044 = vpop.f32.mrf.mxu0
      %v1045 = vpop.f32.mrf.mxu0
      %v1046 = vadd.f32 0.0, %v1045
      %v1047 = vpop.f32.mrf.mxu0
      %1048 = vmatprep.mubr.bf16.mxu0 %v721
      %1049 = vmatmul.mubr.bf16.gmra.mxu0 %v720
      %v1050 = vpop.f32.mrf.mxu0
      %v1051 = vadd.f32 0.0, %v1050
      %v1052 = vpop.f32.mrf.mxu0
      %v1053 = vpop.f32.mrf.mxu0
      %v1054 = vadd.f32 0.0, %v1053
      %v1055 = vpop.f32.mrf.mxu0
      %1056 = vmatprep.mubr.bf16.mxu0 %v725
      %1057 = vmatmul.mubr.bf16.gmra.mxu0 %v724
      %v1058 = vpop.f32.mrf.mxu0
      %v1059 = vadd.f32 0.0, %v1058
      %v1060 = vpop.f32.mrf.mxu0
      %v1061 = vpop.f32.mrf.mxu0
      %v1062 = vadd.f32 0.0, %v1061
      %v1063 = vpop.f32.mrf.mxu0
      %1064 = vmatprep.mubr.bf16.mxu0 %v729
      %1065 = vmatmul.mubr.bf16.gmra.mxu0 %v728
      %v1066 = vpop.f32.mrf.mxu0
      %v1067 = vadd.f32 0.0, %v1066
      %v1068 = vpop.f32.mrf.mxu0
      %v1069 = vpop.f32.mrf.mxu0
      %v1070 = vadd.f32 0.0, %v1069
      %v1071 = vpop.f32.mrf.mxu0
      %1072 = vmatprep.mubr.bf16.mxu0 %v733
      %1073 = vmatmul.mubr.bf16.gmra.mxu0 %v732
      %v1074 = vpop.f32.mrf.mxu0
      %v1075 = vadd.f32 0.0, %v1074
      %v1076 = vpop.f32.mrf.mxu0
      %v1077 = vpop.f32.mrf.mxu0
      %v1078 = vadd.f32 0.0, %v1077
      %v1079 = vpop.f32.mrf.mxu0
      %1080 = vmatprep.mubr.bf16.mxu0 %v737
      %1081 = vmatmul.mubr.bf16.gmra.mxu0 %v736
      %v1082 = vpop.f32.mrf.mxu0
      %v1083 = vadd.f32 0.0, %v1082
      %v1084 = vpop.f32.mrf.mxu0
      %v1085 = vpop.f32.mrf.mxu0
      %v1086 = vadd.f32 0.0, %v1085
      %v1087 = vpop.f32.mrf.mxu0
      %1088 = vmatprep.mubr.bf16.mxu0 %v741
      %1089 = vmatmul.mubr.bf16.gmra.mxu0 %v740
      %v1090 = vpop.f32.mrf.mxu0
      %v1091 = vadd.f32 0.0, %v1090
      %v1092 = vpop.f32.mrf.mxu0
      %v1093 = vpop.f32.mrf.mxu0
      %v1094 = vadd.f32 0.0, %v1093
      %v1095 = vpop.f32.mrf.mxu0
      %1096 = vmatprep.mubr.bf16.mxu0 %v745
      %1097 = vmatmul.mubr.bf16.gmra.mxu0 %v744
      %v1098 = vpop.f32.mrf.mxu0
      %v1099 = vadd.f32 0.0, %v1098
      %v1100 = vpop.f32.mrf.mxu0
      %v1101 = vpop.f32.mrf.mxu0
      %v1102 = vadd.f32 0.0, %v1101
      %v1103 = vpop.f32.mrf.mxu0
      %1104 = vmatprep.mubr.bf16.mxu0 %v749
      %1105 = vmatmul.mubr.bf16.gmra.mxu0 %v748
      %v1106 = vpop.f32.mrf.mxu0
      %v1107 = vadd.f32 0.0, %v1106
      %v1108 = vpop.f32.mrf.mxu0
      %v1109 = vpop.f32.mrf.mxu0
      %v1110 = vadd.f32 0.0, %v1109
      %v1111 = vpop.f32.mrf.mxu0
      %1112 = vmatprep.mubr.bf16.mxu0 %v753
      %1113 = vmatmul.mubr.bf16.gmra.mxu0 %v752
      %v1114 = vpop.f32.mrf.mxu0
      %v1115 = vadd.f32 0.0, %v1114
      %v1116 = vpop.f32.mrf.mxu0
      %v1117 = vpop.f32.mrf.mxu0
      %v1118 = vadd.f32 0.0, %v1117
      %v1119 = vpop.f32.mrf.mxu0
      %1120 = vmatprep.mubr.bf16.mxu0 %v757
      %1121 = vmatmul.mubr.bf16.gmra.mxu0 %v756
      %v1122 = vpop.f32.mrf.mxu0
      %v1123 = vadd.f32 0.0, %v1122
      %v1124 = vpop.f32.mrf.mxu0
      %v1125 = vpop.f32.mrf.mxu0
      %v1126 = vadd.f32 0.0, %v1125
      %v1127 = vpop.f32.mrf.mxu0
      %1128 = vmatprep.mubr.bf16.mxu0 %v761
      %1129 = vmatmul.mubr.bf16.gmra.mxu0 %v760
      %v1130 = vpop.f32.mrf.mxu0
      %v1131 = vadd.f32 0.0, %v1130
      %v1132 = vpop.f32.mrf.mxu0
      %v1133 = vpop.f32.mrf.mxu0
      %v1134 = vadd.f32 0.0, %v1133
      %v1135 = vpop.f32.mrf.mxu0
      %1136 = vmatprep.mubr.bf16.mxu0 %v765
      %1137 = vmatmul.mubr.bf16.gmra.mxu0 %v764
      %v1138 = vpop.f32.mrf.mxu0
      %v1139 = vadd.f32 0.0, %v1138
      %v1140 = vpop.f32.mrf.mxu0
      %v1141 = vpop.f32.mrf.mxu0
      %v1142 = vadd.f32 0.0, %v1141
      %v1143 = vpop.f32.mrf.mxu0
      %1144 = vmatprep.mubr.bf16.mxu0 %v769
      %1145 = vmatmul.mubr.bf16.gmra.mxu0 %v768
      %v1146 = vpop.f32.mrf.mxu0
      %v1147 = vadd.f32 0.0, %v1146
      %v1148 = vpop.f32.mrf.mxu0
      %v1149 = vpop.f32.mrf.mxu0
      %v1150 = vadd.f32 0.0, %v1149
      %v1151 = vpop.f32.mrf.mxu0
      %1152 = vmatprep.mubr.bf16.mxu0 %v773
      %1153 = vmatmul.mubr.bf16.gmra.mxu0 %v772
      %v1154 = vpop.f32.mrf.mxu0
      %v1155 = vadd.f32 0.0, %v1154
      %v1156 = vpop.f32.mrf.mxu0
      %v1157 = vpop.f32.mrf.mxu0
      %v1158 = vadd.f32 0.0, %v1157
      %v1159 = vpop.f32.mrf.mxu0
      %1160 = vmatprep.mubr.bf16.mxu0 %v777
      %1161 = vmatmul.mubr.bf16.gmra.mxu0 %v776
      %v1162 = vpop.f32.mrf.mxu0
      %v1163 = vadd.f32 0.0, %v1162
      %v1164 = vpop.f32.mrf.mxu0
      %v1165 = vpop.f32.mrf.mxu0
      %v1166 = vadd.f32 0.0, %v1165
      %v1167 = vpop.f32.mrf.mxu0
      %1168 = vmatprep.mubr.bf16.mxu0 %v781
      %1169 = vmatmul.mubr.bf16.gmra.mxu0 %v780
      %v1170 = vpop.f32.mrf.mxu0
      %v1171 = vadd.f32 0.0, %v1170
      %v1172 = vpop.f32.mrf.mxu0
      %v1173 = vpop.f32.mrf.mxu0
      %v1174 = vadd.f32 0.0, %v1173
      %v1175 = vpop.f32.mrf.mxu0
      %1176 = vmatprep.mubr.bf16.mxu0 %v785
      %1177 = vmatmul.mubr.bf16.gmra.mxu0 %v784
      %v1178 = vpop.f32.mrf.mxu0
      %v1179 = vadd.f32 0.0, %v1178
      %v1180 = vpop.f32.mrf.mxu0
      %v1181 = vpop.f32.mrf.mxu0
      %v1182 = vadd.f32 0.0, %v1181
      %v1183 = vpop.f32.mrf.mxu0
      %1184 = vmatprep.mubr.bf16.mxu0 %v789
      %1185 = vmatmul.mubr.bf16.gmra.mxu0 %v788
      %v1186 = vpop.f32.mrf.mxu0
      %v1187 = vadd.f32 0.0, %v1186
      %v1188 = vpop.f32.mrf.mxu0
      %v1189 = vpop.f32.mrf.mxu0
      %v1190 = vadd.f32 0.0, %v1189
      %v1191 = vpop.f32.mrf.mxu0
      %1192 = vmatprep.mubr.bf16.mxu0 %v793
      %1193 = vmatmul.mubr.bf16.gmra.mxu0 %v792
      %v1194 = vpop.f32.mrf.mxu0
      %v1195 = vadd.f32 0.0, %v1194
      %v1196 = vpop.f32.mrf.mxu0
      %v1197 = vpop.f32.mrf.mxu0
      %v1198 = vadd.f32 0.0, %v1197
      %v1199 = vpop.f32.mrf.mxu0
      %1200 = vmatprep.mubr.bf16.mxu0 %v797
      %1201 = vmatmul.mubr.bf16.gmra.mxu0 %v796
      %v1202 = vpop.f32.mrf.mxu0
      %v1203 = vadd.f32 0.0, %v1202
      %v1204 = vpop.f32.mrf.mxu0
      %v1205 = vpop.f32.mrf.mxu0
      %v1206 = vadd.f32 0.0, %v1205
      %v1207 = vpop.f32.mrf.mxu0
      %1208 = vmatprep.mubr.bf16.mxu0 %v801
      %1209 = vmatmul.mubr.bf16.gmra.mxu0 %v800
      %v1210 = vpop.f32.mrf.mxu0
      %v1211 = vadd.f32 0.0, %v1210
      %v1212 = vpop.f32.mrf.mxu0
      %v1213 = vpop.f32.mrf.mxu0
      %v1214 = vadd.f32 0.0, %v1213
      %v1215 = vpop.f32.mrf.mxu0
      %1216 = vmatprep.mubr.bf16.mxu0 %v805
      %1217 = vmatmul.mubr.bf16.gmra.mxu0 %v804
      %v1218 = vpop.f32.mrf.mxu0
      %v1219 = vadd.f32 0.0, %v1218
      %v1220 = vpop.f32.mrf.mxu0
      %v1221 = vpop.f32.mrf.mxu0
      %v1222 = vadd.f32 0.0, %v1221
      %v1223 = vpop.f32.mrf.mxu0
      %1224 = vmatprep.mubr.bf16.mxu0 %v809
      %1225 = vmatmul.mubr.bf16.gmra.mxu0 %v808
      %v1226 = vpop.f32.mrf.mxu0
      %v1227 = vadd.f32 0.0, %v1226
      %v1228 = vpop.f32.mrf.mxu0
      %v1229 = vpop.f32.mrf.mxu0
      %v1230 = vadd.f32 0.0, %v1229
      %v1231 = vpop.f32.mrf.mxu0
      %1232 = vmatprep.mubr.bf16.mxu0 %v813
      %1233 = vmatmul.mubr.bf16.gmra.mxu0 %v812
      %v1234 = vpop.f32.mrf.mxu0
      %v1235 = vadd.f32 0.0, %v1234
      %v1236 = vpop.f32.mrf.mxu0
      %v1237 = vpop.f32.mrf.mxu0
      %v1238 = vadd.f32 0.0, %v1237
      %v1239 = vpop.f32.mrf.mxu0
      %1240 = vmatprep.mubr.bf16.mxu0 %v817
      %1241 = vmatmul.mubr.bf16.gmra.mxu0 %v816
      %v1242 = vpop.f32.mrf.mxu0
      %v1243 = vadd.f32 0.0, %v1242
      %v1244 = vpop.f32.mrf.mxu0
      %v1245 = vpop.f32.mrf.mxu0
      %v1246 = vadd.f32 0.0, %v1245
      %v1247 = vpop.f32.mrf.mxu0
      %1248 = vmatprep.mubr.bf16.mxu0 %v821
      %1249 = vmatmul.mubr.bf16.gmra.mxu0 %v820
      %v1250 = vpop.f32.mrf.mxu0
      %v1251 = vadd.f32 0.0, %v1250
      %v1252 = vpop.f32.mrf.mxu0
      %v1253 = vpop.f32.mrf.mxu0
      %v1254 = vadd.f32 0.0, %v1253
      %v1255 = vpop.f32.mrf.mxu0
      %1256 = vmatprep.mubr.bf16.mxu0 %v825
      %1257 = vmatmul.mubr.bf16.gmra.mxu0 %v824
      %v1258 = vpop.f32.mrf.mxu0
      %v1259 = vadd.f32 0.0, %v1258
      %v1260 = vpop.f32.mrf.mxu0
      %v1261 = vpop.f32.mrf.mxu0
      %v1262 = vadd.f32 0.0, %v1261
      %v1263 = vpop.f32.mrf.mxu0
      %1264 = vdwg.mxu0
      %1265 = vmatprep.subr.bf16.mxu0 0
      %1266 = vmatpush1.bf16.xpose.msra.mxu0 0
      %1267 = vmatprep.subr.bf16.mxu0 0
      %1268 = vmatpush1.bf16.xpose.msra.mxu0 0
      %1269 = vmatprep.subr.bf16.mxu0 0
      %1270 = vmatpush1.bf16.xpose.msra.mxu0 0
      %1271 = vmatprep.subr.bf16.mxu0 0
      %1272 = vmatpush1.bf16.xpose.msra.mxu0 0
      %1273 = vmatprep.subr.bf16.mxu0 0
      %1274 = vmatpush1.bf16.xpose.msra.mxu0 0
      %1275 = vmatprep.subr.bf16.mxu0 0
      %1276 = vmatpush1.bf16.xpose.msra.mxu0 0
      %1277 = vmatprep.subr.bf16.mxu0 0
      %1278 = vmatpush1.bf16.xpose.msra.mxu0 0
      %1279 = vmatprep.subr.bf16.mxu0 %v971
      %1280 = vmatpush1.bf16.xpose.msra.mxu0 %v970
      %1281 = vmatprep.subr.bf16.mxu0 0
      %1282 = vmatpush2.bf16.xpose.msra.mxu0 0
      %1283 = vmatprep.subr.bf16.mxu0 0
      %1284 = vmatpush2.bf16.xpose.msra.mxu0 0
      %1285 = vmatprep.subr.bf16.mxu0 0
      %1286 = vmatpush2.bf16.xpose.msra.mxu0 0
      %1287 = vmatprep.subr.bf16.mxu0 0
      %1288 = vmatpush2.bf16.xpose.msra.mxu0 0
      %1289 = vmatprep.subr.bf16.mxu0 0
      %1290 = vmatpush2.bf16.xpose.msra.mxu0 0
      %1291 = vmatprep.subr.bf16.mxu0 0
      %1292 = vmatpush2.bf16.xpose.msra.mxu0 0
      %1293 = vmatprep.subr.bf16.mxu0 0
      %1294 = vmatpush2.bf16.xpose.msra.mxu0 0
      %1295 = vmatprep.subr.bf16.mxu0 0
      %1296 = vmatpush2.bf16.xpose.msra.mxu0 0
      %1297 = vmatprep.mubr.bf16.mxu0 %v703
      %1298 = vmatmul.mubr.bf16.gmra.mxu0 %v702
      %v1299 = vpop.f32.mrf.mxu0
      %v1300 = vadd.f32 %v1011, %v1299
      %v1301 = vpop.f32.mrf.mxu0
      %v1302 = vpop.f32.mrf.mxu0
      %v1303 = vadd.f32 %v1014, %v1302
      %v1304 = vpop.f32.mrf.mxu0
      %1305 = vmatprep.mubr.bf16.mxu0 %v707
      %1306 = vmatmul.mubr.bf16.gmra.mxu0 %v706
      %v1307 = vpop.f32.mrf.mxu0
      %v1308 = vadd.f32 %v1019, %v1307
      %v1309 = vpop.f32.mrf.mxu0
      %v1310 = vpop.f32.mrf.mxu0
      %v1311 = vadd.f32 %v1022, %v1310
      %v1312 = vpop.f32.mrf.mxu0
      %1313 = vmatprep.mubr.bf16.mxu0 %v711
      %1314 = vmatmul.mubr.bf16.gmra.mxu0 %v710
      %v1315 = vpop.f32.mrf.mxu0
      %v1316 = vadd.f32 %v1027, %v1315
      %v1317 = vpop.f32.mrf.mxu0
      %v1318 = vpop.f32.mrf.mxu0
      %v1319 = vadd.f32 %v1030, %v1318
      %v1320 = vpop.f32.mrf.mxu0
      %1321 = vmatprep.mubr.bf16.mxu0 %v715
      %1322 = vmatmul.mubr.bf16.gmra.mxu0 %v714
      %v1323 = vpop.f32.mrf.mxu0
      %v1324 = vadd.f32 %v1035, %v1323
      %v1325 = vpop.f32.mrf.mxu0
      %v1326 = vpop.f32.mrf.mxu0
      %v1327 = vadd.f32 %v1038, %v1326
      %v1328 = vpop.f32.mrf.mxu0
      %1329 = vmatprep.mubr.bf16.mxu0 %v719
      %1330 = vmatmul.mubr.bf16.gmra.mxu0 %v718
      %v1331 = vpop.f32.mrf.mxu0
      %v1332 = vadd.f32 %v1043, %v1331
      %v1333 = vpop.f32.mrf.mxu0
      %v1334 = vpop.f32.mrf.mxu0
      %v1335 = vadd.f32 %v1046, %v1334
      %v1336 = vpop.f32.mrf.mxu0
      %1337 = vmatprep.mubr.bf16.mxu0 %v723
      %1338 = vmatmul.mubr.bf16.gmra.mxu0 %v722
      %v1339 = vpop.f32.mrf.mxu0
      %v1340 = vadd.f32 %v1051, %v1339
      %v1341 = vpop.f32.mrf.mxu0
      %v1342 = vpop.f32.mrf.mxu0
      %v1343 = vadd.f32 %v1054, %v1342
      %v1344 = vpop.f32.mrf.mxu0
      %1345 = vmatprep.mubr.bf16.mxu0 %v727
      %1346 = vmatmul.mubr.bf16.gmra.mxu0 %v726
      %v1347 = vpop.f32.mrf.mxu0
      %v1348 = vadd.f32 %v1059, %v1347
      %v1349 = vpop.f32.mrf.mxu0
      %v1350 = vpop.f32.mrf.mxu0
      %v1351 = vadd.f32 %v1062, %v1350
      %v1352 = vpop.f32.mrf.mxu0
      %1353 = vmatprep.mubr.bf16.mxu0 %v731
      %1354 = vmatmul.mubr.bf16.gmra.mxu0 %v730
      %v1355 = vpop.f32.mrf.mxu0
      %v1356 = vadd.f32 %v1067, %v1355
      %v1357 = vpop.f32.mrf.mxu0
      %v1358 = vpop.f32.mrf.mxu0
      %v1359 = vadd.f32 %v1070, %v1358
      %v1360 = vpop.f32.mrf.mxu0
      %1361 = vmatprep.mubr.bf16.mxu0 %v735
      %1362 = vmatmul.mubr.bf16.gmra.mxu0 %v734
      %v1363 = vpop.f32.mrf.mxu0
      %v1364 = vadd.f32 %v1075, %v1363
      %v1365 = vpop.f32.mrf.mxu0
      %v1366 = vpop.f32.mrf.mxu0
      %v1367 = vadd.f32 %v1078, %v1366
      %v1368 = vpop.f32.mrf.mxu0
      %1369 = vmatprep.mubr.bf16.mxu0 %v739
      %1370 = vmatmul.mubr.bf16.gmra.mxu0 %v738
      %v1371 = vpop.f32.mrf.mxu0
      %v1372 = vadd.f32 %v1083, %v1371
      %v1373 = vpop.f32.mrf.mxu0
      %v1374 = vpop.f32.mrf.mxu0
      %v1375 = vadd.f32 %v1086, %v1374
      %v1376 = vpop.f32.mrf.mxu0
      %1377 = vmatprep.mubr.bf16.mxu0 %v743
      %1378 = vmatmul.mubr.bf16.gmra.mxu0 %v742
      %v1379 = vpop.f32.mrf.mxu0
      %v1380 = vadd.f32 %v1091, %v1379
      %v1381 = vpop.f32.mrf.mxu0
      %v1382 = vpop.f32.mrf.mxu0
      %v1383 = vadd.f32 %v1094, %v1382
      %v1384 = vpop.f32.mrf.mxu0
      %1385 = vmatprep.mubr.bf16.mxu0 %v747
      %1386 = vmatmul.mubr.bf16.gmra.mxu0 %v746
      %v1387 = vpop.f32.mrf.mxu0
      %v1388 = vadd.f32 %v1099, %v1387
      %v1389 = vpop.f32.mrf.mxu0
      %v1390 = vpop.f32.mrf.mxu0
      %v1391 = vadd.f32 %v1102, %v1390
      %v1392 = vpop.f32.mrf.mxu0
      %1393 = vmatprep.mubr.bf16.mxu0 %v751
      %1394 = vmatmul.mubr.bf16.gmra.mxu0 %v750
      %v1395 = vpop.f32.mrf.mxu0
      %v1396 = vadd.f32 %v1107, %v1395
      %v1397 = vpop.f32.mrf.mxu0
      %v1398 = vpop.f32.mrf.mxu0
      %v1399 = vadd.f32 %v1110, %v1398
      %v1400 = vpop.f32.mrf.mxu0
      %1401 = vmatprep.mubr.bf16.mxu0 %v755
      %1402 = vmatmul.mubr.bf16.gmra.mxu0 %v754
      %v1403 = vpop.f32.mrf.mxu0
      %v1404 = vadd.f32 %v1115, %v1403
      %v1405 = vpop.f32.mrf.mxu0
      %v1406 = vpop.f32.mrf.mxu0
      %v1407 = vadd.f32 %v1118, %v1406
      %v1408 = vpop.f32.mrf.mxu0
      %1409 = vmatprep.mubr.bf16.mxu0 %v759
      %1410 = vmatmul.mubr.bf16.gmra.mxu0 %v758
      %v1411 = vpop.f32.mrf.mxu0
      %v1412 = vadd.f32 %v1123, %v1411
      %v1413 = vpop.f32.mrf.mxu0
      %v1414 = vpop.f32.mrf.mxu0
      %v1415 = vadd.f32 %v1126, %v1414
      %v1416 = vpop.f32.mrf.mxu0
      %1417 = vmatprep.mubr.bf16.mxu0 %v763
      %1418 = vmatmul.mubr.bf16.gmra.mxu0 %v762
      %v1419 = vpop.f32.mrf.mxu0
      %v1420 = vadd.f32 %v1131, %v1419
      %v1421 = vpop.f32.mrf.mxu0
      %v1422 = vpop.f32.mrf.mxu0
      %v1423 = vadd.f32 %v1134, %v1422
      %v1424 = vpop.f32.mrf.mxu0
      %1425 = vmatprep.mubr.bf16.mxu0 %v767
      %1426 = vmatmul.mubr.bf16.gmra.mxu0 %v766
      %v1427 = vpop.f32.mrf.mxu0
      %v1428 = vadd.f32 %v1139, %v1427
      %v1429 = vpop.f32.mrf.mxu0
      %v1430 = vpop.f32.mrf.mxu0
      %v1431 = vadd.f32 %v1142, %v1430
      %v1432 = vpop.f32.mrf.mxu0
      %1433 = vmatprep.mubr.bf16.mxu0 %v771
      %1434 = vmatmul.mubr.bf16.gmra.mxu0 %v770
      %v1435 = vpop.f32.mrf.mxu0
      %v1436 = vadd.f32 %v1147, %v1435
      %v1437 = vpop.f32.mrf.mxu0
      %v1438 = vpop.f32.mrf.mxu0
      %v1439 = vadd.f32 %v1150, %v1438
      %v1440 = vpop.f32.mrf.mxu0
      %1441 = vmatprep.mubr.bf16.mxu0 %v775
      %1442 = vmatmul.mubr.bf16.gmra.mxu0 %v774
      %v1443 = vpop.f32.mrf.mxu0
      %v1444 = vadd.f32 %v1155, %v1443
      %v1445 = vpop.f32.mrf.mxu0
      %v1446 = vpop.f32.mrf.mxu0
      %v1447 = vadd.f32 %v1158, %v1446
      %v1448 = vpop.f32.mrf.mxu0
      %1449 = vmatprep.mubr.bf16.mxu0 %v779
      %1450 = vmatmul.mubr.bf16.gmra.mxu0 %v778
      %v1451 = vpop.f32.mrf.mxu0
      %v1452 = vadd.f32 %v1163, %v1451
      %v1453 = vpop.f32.mrf.mxu0
      %v1454 = vpop.f32.mrf.mxu0
      %v1455 = vadd.f32 %v1166, %v1454
      %v1456 = vpop.f32.mrf.mxu0
      %1457 = vmatprep.mubr.bf16.mxu0 %v783
      %1458 = vmatmul.mubr.bf16.gmra.mxu0 %v782
      %v1459 = vpop.f32.mrf.mxu0
      %v1460 = vadd.f32 %v1171, %v1459
      %v1461 = vpop.f32.mrf.mxu0
      %v1462 = vpop.f32.mrf.mxu0
      %v1463 = vadd.f32 %v1174, %v1462
      %v1464 = vpop.f32.mrf.mxu0
      %1465 = vmatprep.mubr.bf16.mxu0 %v787
      %1466 = vmatmul.mubr.bf16.gmra.mxu0 %v786
      %v1467 = vpop.f32.mrf.mxu0
      %v1468 = vadd.f32 %v1179, %v1467
      %v1469 = vpop.f32.mrf.mxu0
      %v1470 = vpop.f32.mrf.mxu0
      %v1471 = vadd.f32 %v1182, %v1470
      %v1472 = vpop.f32.mrf.mxu0
      %1473 = vmatprep.mubr.bf16.mxu0 %v791
      %1474 = vmatmul.mubr.bf16.gmra.mxu0 %v790
      %v1475 = vpop.f32.mrf.mxu0
      %v1476 = vadd.f32 %v1187, %v1475
      %v1477 = vpop.f32.mrf.mxu0
      %v1478 = vpop.f32.mrf.mxu0
      %v1479 = vadd.f32 %v1190, %v1478
      %v1480 = vpop.f32.mrf.mxu0
      %1481 = vmatprep.mubr.bf16.mxu0 %v795
      %1482 = vmatmul.mubr.bf16.gmra.mxu0 %v794
      %v1483 = vpop.f32.mrf.mxu0
      %v1484 = vadd.f32 %v1195, %v1483
      %v1485 = vpop.f32.mrf.mxu0
      %v1486 = vpop.f32.mrf.mxu0
      %v1487 = vadd.f32 %v1198, %v1486
      %v1488 = vpop.f32.mrf.mxu0
      %1489 = vmatprep.mubr.bf16.mxu0 %v799
      %1490 = vmatmul.mubr.bf16.gmra.mxu0 %v798
      %v1491 = vpop.f32.mrf.mxu0
      %v1492 = vadd.f32 %v1203, %v1491
      %v1493 = vpop.f32.mrf.mxu0
      %v1494 = vpop.f32.mrf.mxu0
      %v1495 = vadd.f32 %v1206, %v1494
      %v1496 = vpop.f32.mrf.mxu0
      %1497 = vmatprep.mubr.bf16.mxu0 %v803
      %1498 = vmatmul.mubr.bf16.gmra.mxu0 %v802
      %v1499 = vpop.f32.mrf.mxu0
      %v1500 = vadd.f32 %v1211, %v1499
      %v1501 = vpop.f32.mrf.mxu0
      %v1502 = vpop.f32.mrf.mxu0
      %v1503 = vadd.f32 %v1214, %v1502
      %v1504 = vpop.f32.mrf.mxu0
      %1505 = vmatprep.mubr.bf16.mxu0 %v807
      %1506 = vmatmul.mubr.bf16.gmra.mxu0 %v806
      %v1507 = vpop.f32.mrf.mxu0
      %v1508 = vadd.f32 %v1219, %v1507
      %v1509 = vpop.f32.mrf.mxu0
      %v1510 = vpop.f32.mrf.mxu0
      %v1511 = vadd.f32 %v1222, %v1510
      %v1512 = vpop.f32.mrf.mxu0
      %1513 = vmatprep.mubr.bf16.mxu0 %v811
      %1514 = vmatmul.mubr.bf16.gmra.mxu0 %v810
      %v1515 = vpop.f32.mrf.mxu0
      %v1516 = vadd.f32 %v1227, %v1515
      %v1517 = vpop.f32.mrf.mxu0
      %v1518 = vpop.f32.mrf.mxu0
      %v1519 = vadd.f32 %v1230, %v1518
      %v1520 = vpop.f32.mrf.mxu0
      %1521 = vmatprep.mubr.bf16.mxu0 %v815
      %1522 = vmatmul.mubr.bf16.gmra.mxu0 %v814
      %v1523 = vpop.f32.mrf.mxu0
      %v1524 = vadd.f32 %v1235, %v1523
      %v1525 = vpop.f32.mrf.mxu0
      %v1526 = vpop.f32.mrf.mxu0
      %v1527 = vadd.f32 %v1238, %v1526
      %v1528 = vpop.f32.mrf.mxu0
      %1529 = vmatprep.mubr.bf16.mxu0 %v819
      %1530 = vmatmul.mubr.bf16.gmra.mxu0 %v818
      %v1531 = vpop.f32.mrf.mxu0
      %v1532 = vadd.f32 %v1243, %v1531
      %v1533 = vpop.f32.mrf.mxu0
      %v1534 = vpop.f32.mrf.mxu0
      %v1535 = vadd.f32 %v1246, %v1534
      %v1536 = vpop.f32.mrf.mxu0
      %1537 = vmatprep.mubr.bf16.mxu0 %v823
      %1538 = vmatmul.mubr.bf16.gmra.mxu0 %v822
      %v1539 = vpop.f32.mrf.mxu0
      %v1540 = vadd.f32 %v1251, %v1539
      %v1541 = vpop.f32.mrf.mxu0
      %v1542 = vpop.f32.mrf.mxu0
      %v1543 = vadd.f32 %v1254, %v1542
      %v1544 = vpop.f32.mrf.mxu0
      %1545 = vmatprep.mubr.bf16.mxu0 %v827
      %1546 = vmatmul.mubr.bf16.gmra.mxu0 %v826
      %v1547 = vpop.f32.mrf.mxu0
      %v1548 = vadd.f32 %v1259, %v1547
      %v1549 = vpop.f32.mrf.mxu0
      %v1550 = vpop.f32.mrf.mxu0
      %v1551 = vadd.f32 %v1262, %v1550
      %v1552 = vpop.f32.mrf.mxu0
      %1553 = vdwg.mxu0
      %v1554 = vlaneseq
      %v1555 = vshrl.u32 %v1554, 7
      %v1556 = vadd.s32 %v1555, 8
      %v1557 = vadd.s32 %v1555, 16
      %v1558 = vadd.s32 %v1555, 24
      %v1559 = vadd.s32 %v1555, 32
      %v1560 = vadd.s32 %v1555, 40
      %v1561 = vadd.s32 %v1555, 48
      %v1562 = vadd.s32 %v1555, 56
      %v1563 = vadd.s32 %v1555, 64
      %v1564 = vadd.s32 %v1555, 72
      %v1565 = vadd.s32 %v1555, 80
      %v1566 = vadd.s32 %v1555, 88
      %v1567 = vadd.s32 %v1555, 96
      %v1568 = vadd.s32 %v1555, 104
      %v1569 = vadd.s32 %v1555, 112
      %v1570 = vadd.s32 %v1555, 120
      %v1571 = vadd.s32 %v1555, 128
      %v1572 = vadd.s32 %v1555, 136
      %v1573 = vadd.s32 %v1555, 144
      %v1574 = vadd.s32 %v1555, 152
      %v1575 = vadd.s32 %v1555, 160
      %v1576 = vadd.s32 %v1555, 168
      %v1577 = vadd.s32 %v1555, 176
      %v1578 = vadd.s32 %v1555, 184
      %v1579 = vadd.s32 %v1555, 192
      %v1580 = vadd.s32 %v1555, 200
      %v1581 = vadd.s32 %v1555, 208
      %v1582 = vadd.s32 %v1555, 216
      %v1583 = vadd.s32 %v1555, 224
      %v1584 = vadd.s32 %v1555, 232
      %v1585 = vadd.s32 %v1555, 240
      %v1586 = vadd.s32 %v1555, 248
      %vm1587 = vcmp.eq.s32.totalorder %v1555, 0
      %vm1588 = vcmp.eq.s32.totalorder %v1556, 0
      %vm1589 = vcmp.eq.s32.totalorder %v1557, 0
      %vm1590 = vcmp.eq.s32.totalorder %v1558, 0
      %vm1591 = vcmp.eq.s32.totalorder %v1559, 0
      %vm1592 = vcmp.eq.s32.totalorder %v1560, 0
      %vm1593 = vcmp.eq.s32.totalorder %v1561, 0
      %vm1594 = vcmp.eq.s32.totalorder %v1562, 0
      %vm1595 = vcmp.eq.s32.totalorder %v1563, 0
      %vm1596 = vcmp.eq.s32.totalorder %v1564, 0
      %vm1597 = vcmp.eq.s32.totalorder %v1565, 0
      %vm1598 = vcmp.eq.s32.totalorder %v1566, 0
      %vm1599 = vcmp.eq.s32.totalorder %v1567, 0
      %vm1600 = vcmp.eq.s32.totalorder %v1568, 0
      %vm1601 = vcmp.eq.s32.totalorder %v1569, 0
      %vm1602 = vcmp.eq.s32.totalorder %v1570, 0
      %vm1603 = vcmp.eq.s32.totalorder %v1571, 0
      %vm1604 = vcmp.eq.s32.totalorder %v1572, 0
      %vm1605 = vcmp.eq.s32.totalorder %v1573, 0
      %vm1606 = vcmp.eq.s32.totalorder %v1574, 0
      %vm1607 = vcmp.eq.s32.totalorder %v1575, 0
      %vm1608 = vcmp.eq.s32.totalorder %v1576, 0
      %vm1609 = vcmp.eq.s32.totalorder %v1577, 0
      %vm1610 = vcmp.eq.s32.totalorder %v1578, 0
      %vm1611 = vcmp.eq.s32.totalorder %v1579, 0
      %vm1612 = vcmp.eq.s32.totalorder %v1580, 0
      %vm1613 = vcmp.eq.s32.totalorder %v1581, 0
      %vm1614 = vcmp.eq.s32.totalorder %v1582, 0
      %vm1615 = vcmp.eq.s32.totalorder %v1583, 0
      %vm1616 = vcmp.eq.s32.totalorder %v1584, 0
      %vm1617 = vcmp.eq.s32.totalorder %v1585, 0
      %vm1618 = vcmp.eq.s32.totalorder %v1586, 0
      %v1619 = vsel %vm1587, 0.0, %v1428
      %v1620 = vsel %vm1588, 0.0, %v1431
      %v1621 = vsel %vm1589, 0.0, %v1436
      %v1622 = vsel %vm1590, 0.0, %v1439
      %v1623 = vsel %vm1591, 0.0, %v1444
      %v1624 = vsel %vm1592, 0.0, %v1447
      %v1625 = vsel %vm1593, 0.0, %v1452
      %v1626 = vsel %vm1594, 0.0, %v1455
      %v1627 = vsel %vm1595, 0.0, %v1460
      %v1628 = vsel %vm1596, 0.0, %v1463
      %v1629 = vsel %vm1597, 0.0, %v1468
      %v1630 = vsel %vm1598, 0.0, %v1471
      %v1631 = vsel %vm1599, 0.0, %v1476
      %v1632 = vsel %vm1600, 0.0, %v1479
      %v1633 = vsel %vm1601, 0.0, %v1484
      %v1634 = vsel %vm1602, 0.0, %v1487
      %v1635 = vsel %vm1603, 0.0, %v1492
      %v1636 = vsel %vm1604, 0.0, %v1495
      %v1637 = vsel %vm1605, 0.0, %v1500
      %v1638 = vsel %vm1606, 0.0, %v1503
      %v1639 = vsel %vm1607, 0.0, %v1508
      %v1640 = vsel %vm1608, 0.0, %v1511
      %v1641 = vsel %vm1609, 0.0, %v1516
      %v1642 = vsel %vm1610, 0.0, %v1519
      %v1643 = vsel %vm1611, 0.0, %v1524
      %v1644 = vsel %vm1612, 0.0, %v1527
      %v1645 = vsel %vm1613, 0.0, %v1532
      %v1646 = vsel %vm1614, 0.0, %v1535
      %v1647 = vsel %vm1615, 0.0, %v1540
      %v1648 = vsel %vm1616, 0.0, %v1543
      %v1649 = vsel %vm1617, 0.0, %v1548
      %v1650 = vsel %vm1618, 0.0, %v1551
      %v1651 = vmul.f32 %v1300, %v1300
      %v1652 = vmul.f32 %v1303, %v1303
      %v1653 = vmul.f32 %v1308, %v1308
      %v1654 = vmul.f32 %v1311, %v1311
      %v1655 = vmul.f32 %v1316, %v1316
      %v1656 = vmul.f32 %v1319, %v1319
      %v1657 = vmul.f32 %v1324, %v1324
      %v1658 = vmul.f32 %v1327, %v1327
      %v1659 = vmul.f32 %v1332, %v1332
      %v1660 = vmul.f32 %v1335, %v1335
      %v1661 = vmul.f32 %v1340, %v1340
      %v1662 = vmul.f32 %v1343, %v1343
      %v1663 = vmul.f32 %v1348, %v1348
      %v1664 = vmul.f32 %v1351, %v1351
      %v1665 = vmul.f32 %v1356, %v1356
      %v1666 = vmul.f32 %v1359, %v1359
      %v1667 = vmul.f32 %v1364, %v1364
      %v1668 = vmul.f32 %v1367, %v1367
      %v1669 = vmul.f32 %v1372, %v1372
      %v1670 = vmul.f32 %v1375, %v1375
      %v1671 = vmul.f32 %v1380, %v1380
      %v1672 = vmul.f32 %v1383, %v1383
      %v1673 = vmul.f32 %v1388, %v1388
      %v1674 = vmul.f32 %v1391, %v1391
      %v1675 = vmul.f32 %v1396, %v1396
      %v1676 = vmul.f32 %v1399, %v1399
      %v1677 = vmul.f32 %v1404, %v1404
      %v1678 = vmul.f32 %v1407, %v1407
      %v1679 = vmul.f32 %v1412, %v1412
      %v1680 = vmul.f32 %v1415, %v1415
      %v1681 = vmul.f32 %v1420, %v1420
      %v1682 = vmul.f32 %v1423, %v1423
      %v1683 = vmul.f32 %v1619, %v1619
      %v1684 = vmul.f32 %v1620, %v1620
      %v1685 = vmul.f32 %v1621, %v1621
      %v1686 = vmul.f32 %v1622, %v1622
      %v1687 = vmul.f32 %v1623, %v1623
      %v1688 = vmul.f32 %v1624, %v1624
      %v1689 = vmul.f32 %v1625, %v1625
      %v1690 = vmul.f32 %v1626, %v1626
      %v1691 = vmul.f32 %v1627, %v1627
      %v1692 = vmul.f32 %v1628, %v1628
      %v1693 = vmul.f32 %v1629, %v1629
      %v1694 = vmul.f32 %v1630, %v1630
      %v1695 = vmul.f32 %v1631, %v1631
      %v1696 = vmul.f32 %v1632, %v1632
      %v1697 = vmul.f32 %v1633, %v1633
      %v1698 = vmul.f32 %v1634, %v1634
      %v1699 = vmul.f32 %v1635, %v1635
      %v1700 = vmul.f32 %v1636, %v1636
      %v1701 = vmul.f32 %v1637, %v1637
      %v1702 = vmul.f32 %v1638, %v1638
      %v1703 = vmul.f32 %v1639, %v1639
      %v1704 = vmul.f32 %v1640, %v1640
      %v1705 = vmul.f32 %v1641, %v1641
      %v1706 = vmul.f32 %v1642, %v1642
      %v1707 = vmul.f32 %v1643, %v1643
      %v1708 = vmul.f32 %v1644, %v1644
      %v1709 = vmul.f32 %v1645, %v1645
      %v1710 = vmul.f32 %v1646, %v1646
      %v1711 = vmul.f32 %v1647, %v1647
      %v1712 = vmul.f32 %v1648, %v1648
      %v1713 = vmul.f32 %v1649, %v1649
      %v1714 = vmul.f32 %v1650, %v1650
      %v1715 = vadd.f32 %v1651, %v1683
      %v1716 = vadd.f32 %v1652, %v1684
      %v1717 = vadd.f32 %v1653, %v1685
      %v1718 = vadd.f32 %v1654, %v1686
      %v1719 = vadd.f32 %v1655, %v1687
      %v1720 = vadd.f32 %v1656, %v1688
      %v1721 = vadd.f32 %v1657, %v1689
      %v1722 = vadd.f32 %v1658, %v1690
      %v1723 = vadd.f32 %v1659, %v1691
      %v1724 = vadd.f32 %v1660, %v1692
      %v1725 = vadd.f32 %v1661, %v1693
      %v1726 = vadd.f32 %v1662, %v1694
      %v1727 = vadd.f32 %v1663, %v1695
      %v1728 = vadd.f32 %v1664, %v1696
      %v1729 = vadd.f32 %v1665, %v1697
      %v1730 = vadd.f32 %v1666, %v1698
      %v1731 = vadd.f32 %v1667, %v1699
      %v1732 = vadd.f32 %v1668, %v1700
      %v1733 = vadd.f32 %v1669, %v1701
      %v1734 = vadd.f32 %v1670, %v1702
      %v1735 = vadd.f32 %v1671, %v1703
      %v1736 = vadd.f32 %v1672, %v1704
      %v1737 = vadd.f32 %v1673, %v1705
      %v1738 = vadd.f32 %v1674, %v1706
      %v1739 = vadd.f32 %v1675, %v1707
      %v1740 = vadd.f32 %v1676, %v1708
      %v1741 = vadd.f32 %v1677, %v1709
      %v1742 = vadd.f32 %v1678, %v1710
      %v1743 = vadd.f32 %v1679, %v1711
      %v1744 = vadd.f32 %v1680, %v1712
      %v1745 = vadd.f32 %v1681, %v1713
      %v1746 = vadd.f32 %v1682, %v1714
      %v1747 = vrsqrt.pop %v1715
      %v1748 = vmul.f32 %v1715, %v1747
      %vm1749 = vcmp.eq.f32.partialorder %v1715, inf
      %v1750 = vsel %vm1749, %v1715, %v1748
      %vm1751 = vcmp.eq.f32.partialorder %v1715, 0.0
      %v1752 = vand.u32 %v1715, 2147483648
      %v1753 = vsel %vm1751, %v1752, %v1750
      %v1754 = vrsqrt.pop %v1716
      %v1755 = vmul.f32 %v1716, %v1754
      %vm1756 = vcmp.eq.f32.partialorder %v1716, inf
      %v1757 = vsel %vm1756, %v1716, %v1755
      %vm1758 = vcmp.eq.f32.partialorder %v1716, 0.0
      %v1759 = vand.u32 %v1716, 2147483648
      %v1760 = vsel %vm1758, %v1759, %v1757
      %v1761 = vrsqrt.pop %v1717
      %v1762 = vmul.f32 %v1717, %v1761
      %vm1763 = vcmp.eq.f32.partialorder %v1717, inf
      %v1764 = vsel %vm1763, %v1717, %v1762
      %vm1765 = vcmp.eq.f32.partialorder %v1717, 0.0
      %v1766 = vand.u32 %v1717, 2147483648
      %v1767 = vsel %vm1765, %v1766, %v1764
      %v1768 = vrsqrt.pop %v1718
      %v1769 = vmul.f32 %v1718, %v1768
      %vm1770 = vcmp.eq.f32.partialorder %v1718, inf
      %v1771 = vsel %vm1770, %v1718, %v1769
      %vm1772 = vcmp.eq.f32.partialorder %v1718, 0.0
      %v1773 = vand.u32 %v1718, 2147483648
      %v1774 = vsel %vm1772, %v1773, %v1771
      %v1775 = vrsqrt.pop %v1719
      %v1776 = vmul.f32 %v1719, %v1775
      %vm1777 = vcmp.eq.f32.partialorder %v1719, inf
      %v1778 = vsel %vm1777, %v1719, %v1776
      %vm1779 = vcmp.eq.f32.partialorder %v1719, 0.0
      %v1780 = vand.u32 %v1719, 2147483648
      %v1781 = vsel %vm1779, %v1780, %v1778
      %v1782 = vrsqrt.pop %v1720
      %v1783 = vmul.f32 %v1720, %v1782
      %vm1784 = vcmp.eq.f32.partialorder %v1720, inf
      %v1785 = vsel %vm1784, %v1720, %v1783
      %vm1786 = vcmp.eq.f32.partialorder %v1720, 0.0
      %v1787 = vand.u32 %v1720, 2147483648
      %v1788 = vsel %vm1786, %v1787, %v1785
      %v1789 = vrsqrt.pop %v1721
      %v1790 = vmul.f32 %v1721, %v1789
      %vm1791 = vcmp.eq.f32.partialorder %v1721, inf
      %v1792 = vsel %vm1791, %v1721, %v1790
      %vm1793 = vcmp.eq.f32.partialorder %v1721, 0.0
      %v1794 = vand.u32 %v1721, 2147483648
      %v1795 = vsel %vm1793, %v1794, %v1792
      %v1796 = vrsqrt.pop %v1722
      %v1797 = vmul.f32 %v1722, %v1796
      %vm1798 = vcmp.eq.f32.partialorder %v1722, inf
      %v1799 = vsel %vm1798, %v1722, %v1797
      %vm1800 = vcmp.eq.f32.partialorder %v1722, 0.0
      %v1801 = vand.u32 %v1722, 2147483648
      %v1802 = vsel %vm1800, %v1801, %v1799
      %v1803 = vrsqrt.pop %v1723
      %v1804 = vmul.f32 %v1723, %v1803
      %vm1805 = vcmp.eq.f32.partialorder %v1723, inf
      %v1806 = vsel %vm1805, %v1723, %v1804
      %vm1807 = vcmp.eq.f32.partialorder %v1723, 0.0
      %v1808 = vand.u32 %v1723, 2147483648
      %v1809 = vsel %vm1807, %v1808, %v1806
      %v1810 = vrsqrt.pop %v1724
      %v1811 = vmul.f32 %v1724, %v1810
      %vm1812 = vcmp.eq.f32.partialorder %v1724, inf
      %v1813 = vsel %vm1812, %v1724, %v1811
      %vm1814 = vcmp.eq.f32.partialorder %v1724, 0.0
      %v1815 = vand.u32 %v1724, 2147483648
      %v1816 = vsel %vm1814, %v1815, %v1813
      %v1817 = vrsqrt.pop %v1725
      %v1818 = vmul.f32 %v1725, %v1817
      %vm1819 = vcmp.eq.f32.partialorder %v1725, inf
      %v1820 = vsel %vm1819, %v1725, %v1818
      %vm1821 = vcmp.eq.f32.partialorder %v1725, 0.0
      %v1822 = vand.u32 %v1725, 2147483648
      %v1823 = vsel %vm1821, %v1822, %v1820
      %v1824 = vrsqrt.pop %v1726
      %v1825 = vmul.f32 %v1726, %v1824
      %vm1826 = vcmp.eq.f32.partialorder %v1726, inf
      %v1827 = vsel %vm1826, %v1726, %v1825
      %vm1828 = vcmp.eq.f32.partialorder %v1726, 0.0
      %v1829 = vand.u32 %v1726, 2147483648
      %v1830 = vsel %vm1828, %v1829, %v1827
      %v1831 = vrsqrt.pop %v1727
      %v1832 = vmul.f32 %v1727, %v1831
      %vm1833 = vcmp.eq.f32.partialorder %v1727, inf
      %v1834 = vsel %vm1833, %v1727, %v1832
      %vm1835 = vcmp.eq.f32.partialorder %v1727, 0.0
      %v1836 = vand.u32 %v1727, 2147483648
      %v1837 = vsel %vm1835, %v1836, %v1834
      %v1838 = vrsqrt.pop %v1728
      %v1839 = vmul.f32 %v1728, %v1838
      %vm1840 = vcmp.eq.f32.partialorder %v1728, inf
      %v1841 = vsel %vm1840, %v1728, %v1839
      %vm1842 = vcmp.eq.f32.partialorder %v1728, 0.0
      %v1843 = vand.u32 %v1728, 2147483648
      %v1844 = vsel %vm1842, %v1843, %v1841
      %v1845 = vrsqrt.pop %v1729
      %v1846 = vmul.f32 %v1729, %v1845
      %vm1847 = vcmp.eq.f32.partialorder %v1729, inf
      %v1848 = vsel %vm1847, %v1729, %v1846
      %vm1849 = vcmp.eq.f32.partialorder %v1729, 0.0
      %v1850 = vand.u32 %v1729, 2147483648
      %v1851 = vsel %vm1849, %v1850, %v1848
      %v1852 = vrsqrt.pop %v1730
      %v1853 = vmul.f32 %v1730, %v1852
      %vm1854 = vcmp.eq.f32.partialorder %v1730, inf
      %v1855 = vsel %vm1854, %v1730, %v1853
      %vm1856 = vcmp.eq.f32.partialorder %v1730, 0.0
      %v1857 = vand.u32 %v1730, 2147483648
      %v1858 = vsel %vm1856, %v1857, %v1855
      %v1859 = vrsqrt.pop %v1731
      %v1860 = vmul.f32 %v1731, %v1859
      %vm1861 = vcmp.eq.f32.partialorder %v1731, inf
      %v1862 = vsel %vm1861, %v1731, %v1860
      %vm1863 = vcmp.eq.f32.partialorder %v1731, 0.0
      %v1864 = vand.u32 %v1731, 2147483648
      %v1865 = vsel %vm1863, %v1864, %v1862
      %v1866 = vrsqrt.pop %v1732
      %v1867 = vmul.f32 %v1732, %v1866
      %vm1868 = vcmp.eq.f32.partialorder %v1732, inf
      %v1869 = vsel %vm1868, %v1732, %v1867
      %vm1870 = vcmp.eq.f32.partialorder %v1732, 0.0
      %v1871 = vand.u32 %v1732, 2147483648
      %v1872 = vsel %vm1870, %v1871, %v1869
      %v1873 = vrsqrt.pop %v1733
      %v1874 = vmul.f32 %v1733, %v1873
      %vm1875 = vcmp.eq.f32.partialorder %v1733, inf
      %v1876 = vsel %vm1875, %v1733, %v1874
      %vm1877 = vcmp.eq.f32.partialorder %v1733, 0.0
      %v1878 = vand.u32 %v1733, 2147483648
      %v1879 = vsel %vm1877, %v1878, %v1876
      %v1880 = vrsqrt.pop %v1734
      %v1881 = vmul.f32 %v1734, %v1880
      %vm1882 = vcmp.eq.f32.partialorder %v1734, inf
      %v1883 = vsel %vm1882, %v1734, %v1881
      %vm1884 = vcmp.eq.f32.partialorder %v1734, 0.0
      %v1885 = vand.u32 %v1734, 2147483648
      %v1886 = vsel %vm1884, %v1885, %v1883
      %v1887 = vrsqrt.pop %v1735
      %v1888 = vmul.f32 %v1735, %v1887
      %vm1889 = vcmp.eq.f32.partialorder %v1735, inf
      %v1890 = vsel %vm1889, %v1735, %v1888
      %vm1891 = vcmp.eq.f32.partialorder %v1735, 0.0
      %v1892 = vand.u32 %v1735, 2147483648
      %v1893 = vsel %vm1891, %v1892, %v1890
      %v1894 = vrsqrt.pop %v1736
      %v1895 = vmul.f32 %v1736, %v1894
      %vm1896 = vcmp.eq.f32.partialorder %v1736, inf
      %v1897 = vsel %vm1896, %v1736, %v1895
      %vm1898 = vcmp.eq.f32.partialorder %v1736, 0.0
      %v1899 = vand.u32 %v1736, 2147483648
      %v1900 = vsel %vm1898, %v1899, %v1897
      %v1901 = vrsqrt.pop %v1737
      %v1902 = vmul.f32 %v1737, %v1901
      %vm1903 = vcmp.eq.f32.partialorder %v1737, inf
      %v1904 = vsel %vm1903, %v1737, %v1902
      %vm1905 = vcmp.eq.f32.partialorder %v1737, 0.0
      %v1906 = vand.u32 %v1737, 2147483648
      %v1907 = vsel %vm1905, %v1906, %v1904
      %v1908 = vrsqrt.pop %v1738
      %v1909 = vmul.f32 %v1738, %v1908
      %vm1910 = vcmp.eq.f32.partialorder %v1738, inf
      %v1911 = vsel %vm1910, %v1738, %v1909
      %vm1912 = vcmp.eq.f32.partialorder %v1738, 0.0
      %v1913 = vand.u32 %v1738, 2147483648
      %v1914 = vsel %vm1912, %v1913, %v1911
      %v1915 = vrsqrt.pop %v1739
      %v1916 = vmul.f32 %v1739, %v1915
      %vm1917 = vcmp.eq.f32.partialorder %v1739, inf
      %v1918 = vsel %vm1917, %v1739, %v1916
      %vm1919 = vcmp.eq.f32.partialorder %v1739, 0.0
      %v1920 = vand.u32 %v1739, 2147483648
      %v1921 = vsel %vm1919, %v1920, %v1918
      %v1922 = vrsqrt.pop %v1740
      %v1923 = vmul.f32 %v1740, %v1922
      %vm1924 = vcmp.eq.f32.partialorder %v1740, inf
      %v1925 = vsel %vm1924, %v1740, %v1923
      %vm1926 = vcmp.eq.f32.partialorder %v1740, 0.0
      %v1927 = vand.u32 %v1740, 2147483648
      %v1928 = vsel %vm1926, %v1927, %v1925
      %v1929 = vrsqrt.pop %v1741
      %v1930 = vmul.f32 %v1741, %v1929
      %vm1931 = vcmp.eq.f32.partialorder %v1741, inf
      %v1932 = vsel %vm1931, %v1741, %v1930
      %vm1933 = vcmp.eq.f32.partialorder %v1741, 0.0
      %v1934 = vand.u32 %v1741, 2147483648
      %v1935 = vsel %vm1933, %v1934, %v1932
      %v1936 = vrsqrt.pop %v1742
      %v1937 = vmul.f32 %v1742, %v1936
      %vm1938 = vcmp.eq.f32.partialorder %v1742, inf
      %v1939 = vsel %vm1938, %v1742, %v1937
      %vm1940 = vcmp.eq.f32.partialorder %v1742, 0.0
      %v1941 = vand.u32 %v1742, 2147483648
      %v1942 = vsel %vm1940, %v1941, %v1939
      %v1943 = vrsqrt.pop %v1743
      %v1944 = vmul.f32 %v1743, %v1943
      %vm1945 = vcmp.eq.f32.partialorder %v1743, inf
      %v1946 = vsel %vm1945, %v1743, %v1944
      %vm1947 = vcmp.eq.f32.partialorder %v1743, 0.0
      %v1948 = vand.u32 %v1743, 2147483648
      %v1949 = vsel %vm1947, %v1948, %v1946
      %v1950 = vrsqrt.pop %v1744
      %v1951 = vmul.f32 %v1744, %v1950
      %vm1952 = vcmp.eq.f32.partialorder %v1744, inf
      %v1953 = vsel %vm1952, %v1744, %v1951
      %vm1954 = vcmp.eq.f32.partialorder %v1744, 0.0
      %v1955 = vand.u32 %v1744, 2147483648
      %v1956 = vsel %vm1954, %v1955, %v1953
      %v1957 = vrsqrt.pop %v1745
      %v1958 = vmul.f32 %v1745, %v1957
      %vm1959 = vcmp.eq.f32.partialorder %v1745, inf
      %v1960 = vsel %vm1959, %v1745, %v1958
      %vm1961 = vcmp.eq.f32.partialorder %v1745, 0.0
      %v1962 = vand.u32 %v1745, 2147483648
      %v1963 = vsel %vm1961, %v1962, %v1960
      %v1964 = vrsqrt.pop %v1746
      %v1965 = vmul.f32 %v1746, %v1964
      %vm1966 = vcmp.eq.f32.partialorder %v1746, inf
      %v1967 = vsel %vm1966, %v1746, %v1965
      %vm1968 = vcmp.eq.f32.partialorder %v1746, 0.0
      %v1969 = vand.u32 %v1746, 2147483648
      %v1970 = vsel %vm1968, %v1969, %v1967
      %vm1971 = vcmask 72704
      %1972 = vst.msk [vmem:[%s182] sm:$0xff] %vm1971, %v1753
      %1973 = vst.msk [vmem:[%s182 + $0x8] sm:$0xff] %vm1971, %v1760
      %1974 = vst.msk [vmem:[%s182 + $0x10] sm:$0xff] %vm1971, %v1767
      %1975 = vst.msk [vmem:[%s182 + $0x18] sm:$0xff] %vm1971, %v1774
      %1976 = vst.msk [vmem:[%s182 + $0x20] sm:$0xff] %vm1971, %v1781
      %1977 = vst.msk [vmem:[%s182 + $0x28] sm:$0xff] %vm1971, %v1788
      %1978 = vst.msk [vmem:[%s182 + $0x30] sm:$0xff] %vm1971, %v1795
      %1979 = vst.msk [vmem:[%s182 + $0x38] sm:$0xff] %vm1971, %v1802
      %1980 = vst.msk [vmem:[%s182 + $0x40] sm:$0xff] %vm1971, %v1809
      %1981 = vst.msk [vmem:[%s182 + $0x48] sm:$0xff] %vm1971, %v1816
      %1982 = vst.msk [vmem:[%s182 + $0x50] sm:$0xff] %vm1971, %v1823
      %1983 = vst.msk [vmem:[%s182 + $0x58] sm:$0xff] %vm1971, %v1830
      %1984 = vst.msk [vmem:[%s182 + $0x60] sm:$0xff] %vm1971, %v1837
      %1985 = vst.msk [vmem:[%s182 + $0x68] sm:$0xff] %vm1971, %v1844
      %1986 = vst.msk [vmem:[%s182 + $0x70] sm:$0xff] %vm1971, %v1851
      %1987 = vst.msk [vmem:[%s182 + $0x78] sm:$0xff] %vm1971, %v1858
      %1988 = vst.msk [vmem:[%s182 + $0x80] sm:$0xff] %vm1971, %v1865
      %1989 = vst.msk [vmem:[%s182 + $0x88] sm:$0xff] %vm1971, %v1872
      %1990 = vst.msk [vmem:[%s182 + $0x90] sm:$0xff] %vm1971, %v1879
      %1991 = vst.msk [vmem:[%s182 + $0x98] sm:$0xff] %vm1971, %v1886
      %1992 = vst.msk [vmem:[%s182 + $0xa0] sm:$0xff] %vm1971, %v1893
      %1993 = vst.msk [vmem:[%s182 + $0xa8] sm:$0xff] %vm1971, %v1900
      %1994 = vst.msk [vmem:[%s182 + $0xb0] sm:$0xff] %vm1971, %v1907
      %1995 = vst.msk [vmem:[%s182 + $0xb8] sm:$0xff] %vm1971, %v1914
      %1996 = vst.msk [vmem:[%s182 + $0xc0] sm:$0xff] %vm1971, %v1921
      %1997 = vst.msk [vmem:[%s182 + $0xc8] sm:$0xff] %vm1971, %v1928
      %1998 = vst.msk [vmem:[%s182 + $0xd0] sm:$0xff] %vm1971, %v1935
      %1999 = vst.msk [vmem:[%s182 + $0xd8] sm:$0xff] %vm1971, %v1942
      %2000 = vst.msk [vmem:[%s182 + $0xe0] sm:$0xff] %vm1971, %v1949
      %2001 = vst.msk [vmem:[%s182 + $0xe8] sm:$0xff] %vm1971, %v1956
      %2002 = vst.msk [vmem:[%s182 + $0xf0] sm:$0xff] %vm1971, %v1963
      %2003 = vst.msk [vmem:[%s182 + $0xf8] sm:$0xff] %vm1971, %v1970
      %v2004 = vand.u32 2147483647, %v1428
      %vm2005 = vcmask 65536
      %2006 = vst.msk [vmem:[%s182 + $0x100] sm:$0x1] %vm2005, %v2004
      %p2007 = scmp.lt.s32.totalorder %s17, 1
      %s2008 = scalar_select %p2007, %s17, 1
      %p2009 = scmp.lt.s32.totalorder %s18, 0
      %s2010 = scalar_select %p2009, %s18, 0
      %s2011 = smul.addr %s2008, 33
      %s2012 = sadd.s32 %s2010, %s2011
      %s2013 = smul.addr %s2012, 8
      %s2014 = scalar_lea.vmem %s2, %s2013
      // Predicated region
      $region29: #{feat_pipeline.1} parent=27 // pred_check
        %p2015 = pneg %p94
      $region30: #{feat_pipeline.1} parent=27 // pred_check_branch
        %2017 = sbr.rel (%p2015) target = $region32
      $region31: #{feat_pipeline.1} parent=27 // pred_region
        _
      $region32: #{feat_pipeline.1} parent=27 // pred_fallthru
        _
    $region28: #{feat_pipeline.1} parent=5 // pred_fallthru
      _
    %p2018 = scmp.le.s32.totalorder 2, %s8
    // Predicated region
    $region33: #{feat_pipeline.1} parent=5 // pred_check
      %p2019 = pneg %p2018
    $region34: #{feat_pipeline.1} parent=5 // pred_check_branch
      %2021 = sbr.rel (%p2019) target = $region36
    $region35: #{feat_pipeline.1} parent=5 // pred_region
      %s2022 = ssub.s32 %s8, 2
      // Predicated region
      $region37: #{feat_pipeline.1} parent=35 // pred_check
        %p2023 = pneg %p100
      $region38: #{feat_pipeline.1} parent=35 // pred_check_branch
        %2025 = sbr.rel (%p2023) target = $region40
      $region39: #{feat_pipeline.1} parent=35 // pred_region
        %p2026 = scmp.lt.s32.totalorder %s19, 1
        %s2027 = scalar_select %p2026, %s19, 1
        %p2028 = scmp.lt.s32.totalorder %s20, 0
        %s2029 = scalar_select %p2028, %s20, 0
        %s2030 = smul.addr %s2027, 33
        %s2031 = sadd.s32 %s2029, %s2030
        %s2032 = smul.addr %s2031, 8
        %s2033 = scalar_lea.vmem %s2, %s2032
      $region40: #{feat_pipeline.1} parent=35 // pred_fallthru
        _
    $region36: #{feat_pipeline.1} parent=5 // pred_fallthru
      _
  $region6: #{feat_pipeline.1} parent=0 // loop_footer
    %s12 = sadd.s32 1, %s8
  $region7: #{feat_pipeline.1} parent=0 // loop_footer_branch
    %7 = sbr.rel target = $region3
  $region8: #{feat_pipeline.1} parent=0 // loop_exit
    _

</llo_original>
